<compile_context>
chip_gen: v6e
topology: v6e:2x2x1
jax: 0.10.0
libtpu: 0.0.40
codegen_flags: <defaults>
</compile_context>

<pallas_src>
import functools

import jax
import jax.numpy as jnp
from jax.experimental import pallas as pl
from jax.experimental.pallas import tpu as pltpu


NEG_BIG = -1e30  # masks padded logit lanes before the logsumexp


def gru_chunk_kernel(x_ref, h0_ref,
                     wih_r_ref, wih_z_ref, wih_n_ref,
                     whh_r_ref, whh_z_ref, whh_n_ref,
                     b_r_ref, b_z_ref, b_in_ref, b_hn_ref,
                     wout_ref, bout_ref,
                     logp_ref, hT_ref,
                     h_scr):
    """One T-chunk of the GRU.

    x_ref:    (t_chunk*B, H) bf16   embedded inputs for this chunk (row = t*B+b)
    h0_ref:   (B, H)         f32    initial hidden
    wih_*:    (H, H)         bf16   W_ih^T per gate (r, z, n)
    whh_*:    (H, H)         bf16   W_hh^T per gate
    b_r/b_z:  (1, H)         f32    b_ih + b_hh folded (r / z gates)
    b_in:     (1, H)         f32    b_ih (n gate)
    b_hn:     (1, H)         f32    b_hh (n gate, must stay inside r*(...))
    wout_ref: (H, OPAD)      bf16   W_out^T, zero-padded to 128 lanes
    bout_ref: (1, OPAD)      f32    b_out, padding filled with NEG_BIG
    logp_ref: (t_chunk*B, OPAD) f32 output log-probs (lane-dense store)
    hT_ref:   (B, H)         f32    final hidden (resident, constant block)
    h_scr:    (B, H)         f32    VMEM scratch carrying h across T chunks
    """
    B, H = h0_ref.shape
    t_chunk = x_ref.shape[0] // B

    # Initialize the carried hidden state on the first T-chunk only.
    @pl.when(pl.program_id(0) == 0)
    def _():
        h_scr[...] = h0_ref[...]

    # ---- hoisted input projection: one big-M matmul per gate per chunk ----
    x = x_ref[...]                                           # (t_chunk*B, H)
    gi_r = jnp.dot(x, wih_r_ref[...],
                   preferred_element_type=jnp.float32) + b_r_ref[...]
    gi_z = jnp.dot(x, wih_z_ref[...],
                   preferred_element_type=jnp.float32) + b_z_ref[...]
    gi_n = jnp.dot(x, wih_n_ref[...],
                   preferred_element_type=jnp.float32) + b_in_ref[...]

    w_hh_r = whh_r_ref[...]
    w_hh_z = whh_z_ref[...]
    w_hh_n = whh_n_ref[...]
    b_hn = b_hn_ref[...]

    # ---- serial recurrence (fully unrolled, t_chunk is a small static) ----
    h = h_scr[...]                                           # (B, H) f32
    hs = []
    for t in range(t_chunk):
        hb = h.astype(jnp.bfloat16)
        gh_r = jnp.dot(hb, w_hh_r, preferred_element_type=jnp.float32)
        gh_z = jnp.dot(hb, w_hh_z, preferred_element_type=jnp.float32)
        gh_n = jnp.dot(hb, w_hh_n, preferred_element_type=jnp.float32) + b_hn
        lo = t * B
        r = jax.nn.sigmoid(gi_r[lo:lo + B] + gh_r)
        z = jax.nn.sigmoid(gi_z[lo:lo + B] + gh_z)
        n = jnp.tanh(gi_n[lo:lo + B] + r * gh_n)
        h = (1.0 - z) * n + z * h
        hs.append(h)

    h_scr[...] = h

    # Final hidden: constant (resident) output block, only DMA'd back after the
    # last grid step -> write it just once, on the last chunk.
    @pl.when(pl.program_id(0) == pl.num_programs(0) - 1)
    def _():
        hT_ref[...] = h

    # ---- hoisted output projection + log-softmax for the whole chunk ------
    h_hist = jnp.concatenate(hs, axis=0).astype(jnp.bfloat16)   # (t_chunk*B, H)
    logits = jnp.dot(h_hist, wout_ref[...],
                     preferred_element_type=jnp.float32) + bout_ref[...]
    m = jnp.max(logits, axis=-1, keepdims=True)
    lse = m + jnp.log(jnp.sum(jnp.exp(logits - m), axis=-1, keepdims=True))
    logp_ref[...] = logits - lse                # lane-dense (t_chunk*B, 128) store


def _pick_t_chunk(T, B, requested=None):
    """Choose a T-chunk that divides T and keeps chunk rows sublane-aligned."""
    def ok(d):
        return T % d == 0 and ((d * B) % 8 == 0 or d == T)

    if requested is not None and ok(requested):
        return requested
    best = T
    for d in range(1, T + 1):
        if ok(d) and d * B <= 512:      # ~512-row chunks: good DMA/compute overlap
            best = d
    return best


@functools.partial(jax.jit, static_argnames=("t_chunk",))
def gru_model_forward(inputs, hidden, params, t_chunk=None):
    """Mirrors GRUmodel.forward(inputs, hidden).

    inputs: (B, T) int32 token ids in [0, output_size)
    hidden: (1, B, H) float32
    returns (output (B, T, O) log-probs, hidden (1, B, H))
    """
    emb_w = params["emb"]                                    # (O, H)
    B, T = inputs.shape
    H = emb_w.shape[1]
    O = params["w_out"].shape[0]
    OPAD = max(128, ((O + 127) // 128) * 128)

    tc = _pick_t_chunk(T, B, t_chunk)
    num_chunks = T // tc

    # Embedding lookup (gather) — glue, plain JAX.
    emb = jnp.take(emb_w, inputs, axis=0)                    # (B, T, H)
    x = jnp.transpose(emb, (1, 0, 2)).reshape(T * B, H)      # time-major rows
    x = x.astype(jnp.bfloat16)

    h0 = hidden[0].astype(jnp.float32)                       # (B, H)

    w_ih = params["w_ih"].astype(jnp.float32)                # (3H, H), gates r,z,n
    w_hh = params["w_hh"].astype(jnp.float32)
    b_ih = params["b_ih"].astype(jnp.float32)
    b_hh = params["b_hh"].astype(jnp.float32)

    # Per-gate transposed weight slabs; bf16 MXU operands.
    wih_r = w_ih[0:H].T.astype(jnp.bfloat16)
    wih_z = w_ih[H:2 * H].T.astype(jnp.bfloat16)
    wih_n = w_ih[2 * H:3 * H].T.astype(jnp.bfloat16)
    whh_r = w_hh[0:H].T.astype(jnp.bfloat16)
    whh_z = w_hh[H:2 * H].T.astype(jnp.bfloat16)
    whh_n = w_hh[2 * H:3 * H].T.astype(jnp.bfloat16)

    # Fold b_ih (and the r/z parts of b_hh) into the hoisted input projection.
    b_r = (b_ih[0:H] + b_hh[0:H]).reshape(1, H)
    b_z = (b_ih[H:2 * H] + b_hh[H:2 * H]).reshape(1, H)
    b_in = b_ih[2 * H:3 * H].reshape(1, H)
    b_hn = b_hh[2 * H:3 * H].reshape(1, H)

    # Output projection padded to a lane-dense 128-wide slab.
    wout = jnp.zeros((H, OPAD), jnp.float32).at[:, :O].set(params["w_out"].T)
    wout = wout.astype(jnp.bfloat16)
    bout = jnp.full((1, OPAD), NEG_BIG, jnp.float32).at[0, :O].set(params["b_out"])

    def const(shape):
        return pl.BlockSpec(shape, lambda t: (0, 0))

    grid_spec = pltpu.PrefetchScalarGridSpec(
        num_scalar_prefetch=0,
        grid=(num_chunks,),
        in_specs=[
            pl.BlockSpec((tc * B, H), lambda t: (t, 0)),     # x chunk
            const((B, H)),                                   # h0
            const((H, H)), const((H, H)), const((H, H)),     # W_ih^T r,z,n
            const((H, H)), const((H, H)), const((H, H)),     # W_hh^T r,z,n
            const((1, H)), const((1, H)), const((1, H)), const((1, H)),
            const((H, OPAD)), const((1, OPAD)),
        ],
        out_specs=(
            pl.BlockSpec((tc * B, OPAD), lambda t: (t, 0)),  # log-probs chunk
            const((B, H)),                                   # final hidden
        ),
        scratch_shapes=[pltpu.VMEM((B, H), jnp.float32)],    # carried h
    )

    logp_flat, hT = pl.pallas_call(
        gru_chunk_kernel,
        grid_spec=grid_spec,
        out_shape=(
            jax.ShapeDtypeStruct((T * B, OPAD), jnp.float32),
            jax.ShapeDtypeStruct((B, H), jnp.float32),
        ),
        compiler_params=pltpu.CompilerParams(
            dimension_semantics=("arbitrary",),   # h is carried across T chunks
            vmem_limit_bytes=48 * 1024 * 1024,    # safe on v5e/v6e/v7x VMEM
        ),
    )(x, h0, wih_r, wih_z, wih_n, whh_r, whh_z, whh_n,
      b_r, b_z, b_in, b_hn, wout, bout)

    # TODO(synk): for v7x, split B into >=2 blocks on a leading "parallel"
    # grid axis (needs B a multiple of 8 per block) to use both TensorCores.
    logp = logp_flat.reshape(T, B, OPAD)[:, :, :O]
    output = jnp.transpose(logp, (1, 0, 2))                  # (B, T, O) batch_first
    return output, hT[None]                                  # hidden: (1, B, H)


def init_params(key, hidden_size, output_size):
    ks = jax.random.split(key, 7)
    scale = 1.0 / jnp.sqrt(hidden_size)
    return {
        "emb":   jax.random.normal(ks[0], (output_size, hidden_size), jnp.float32),
        "w_ih":  jax.random.uniform(ks[1], (3 * hidden_size, hidden_size),
                                    jnp.float32, -scale, scale),
        "w_hh":  jax.random.uniform(ks[2], (3 * hidden_size, hidden_size),
                                    jnp.float32, -scale, scale),
        "b_ih":  jax.random.uniform(ks[3], (3 * hidden_size,), jnp.float32,
                                    -scale, scale),
        "b_hh":  jax.random.uniform(ks[4], (3 * hidden_size,), jnp.float32,
                                    -scale, scale),
        "w_out": jax.random.uniform(ks[5], (output_size, hidden_size),
                                    jnp.float32, -scale, scale),
        "b_out": jax.random.uniform(ks[6], (output_size,), jnp.float32,
                                    -scale, scale),
    }


def gru_reference(inputs, hidden, params):
    """Pure-JAX f32 reference mirroring PyTorch GRU semantics."""
    emb = jnp.take(params["emb"], inputs, axis=0)            # (B, T, H)
    B, T, H = emb.shape
    w_ih, w_hh = params["w_ih"], params["w_hh"]
    b_ih, b_hh = params["b_ih"], params["b_hh"]
    h = hidden[0]
    outs = []
    for t in range(T):
        x_t = emb[:, t, :]
        gi = x_t @ w_ih.T + b_ih
        gh = h @ w_hh.T + b_hh
        r = jax.nn.sigmoid(gi[:, :H] + gh[:, :H])
        z = jax.nn.sigmoid(gi[:, H:2 * H] + gh[:, H:2 * H])
        n = jnp.tanh(gi[:, 2 * H:] + r * gh[:, 2 * H:])
        h = (1.0 - z) * n + z * h
        outs.append(h)
    hs = jnp.stack(outs, axis=1)                             # (B, T, H)
    logits = hs @ params["w_out"].T + params["b_out"]
    return jax.nn.log_softmax(logits, axis=-1), h[None]


if __name__ == "__main__":
    B, T, H, O = 2, 8, 32, 16          # batch, seq, hidden_size, output_size

    key = jax.random.PRNGKey(0)
    k_param, k_tok, k_h = jax.random.split(key, 3)

    params = init_params(k_param, H, O)
    inputs = jax.random.randint(k_tok, (B, T), 0, O, dtype=jnp.int32)
    hidden = jax.random.normal(k_h, (1, B, H), jnp.float32)

    output, h_out = gru_model_forward(inputs, hidden, params, t_chunk=4)
    jax.block_until_ready((output, h_out))

    assert output.shape == (B, T, O)
    assert h_out.shape == (1, B, H)
    # log-softmax rows should sum to 1 in prob space
    assert jnp.allclose(jnp.sum(jnp.exp(output), axis=-1), 1.0, atol=1e-4)

    # compare against a pure-JAX f32 reference (bf16 MXU operands -> loose tol)
    ref_out, ref_h = gru_reference(inputs, hidden, params)
    assert jnp.allclose(output, ref_out, atol=1e-1)
    assert jnp.allclose(h_out, ref_h, atol=5e-2)

    print("KERNEL_OK")
</pallas_src>

<mosaic_0001>
module attributes {stable_mosaic.version = 11 : i64} {
  func.func @gru_chunk_kernel(%arg0: i32, %arg1: memref<8x32xbf16, #tpu.memory_space<vmem>>, %arg2: memref<2x32xf32, #tpu.memory_space<vmem>>, %arg3: memref<32x32xbf16, #tpu.memory_space<vmem>>, %arg4: memref<32x32xbf16, #tpu.memory_space<vmem>>, %arg5: memref<32x32xbf16, #tpu.memory_space<vmem>>, %arg6: memref<32x32xbf16, #tpu.memory_space<vmem>>, %arg7: memref<32x32xbf16, #tpu.memory_space<vmem>>, %arg8: memref<32x32xbf16, #tpu.memory_space<vmem>>, %arg9: memref<1x32xf32, #tpu.memory_space<vmem>>, %arg10: memref<1x32xf32, #tpu.memory_space<vmem>>, %arg11: memref<1x32xf32, #tpu.memory_space<vmem>>, %arg12: memref<1x32xf32, #tpu.memory_space<vmem>>, %arg13: memref<32x128xbf16, #tpu.memory_space<vmem>>, %arg14: memref<1x128xf32, #tpu.memory_space<vmem>>, %arg15: memref<8x128xf32, #tpu.memory_space<vmem>>, %arg16: memref<2x32xf32, #tpu.memory_space<vmem>>, %arg17: memref<2x32xf32, #tpu.memory_space<vmem>>) attributes {dimension_semantics = [#tpu.dimension_semantics<arbitrary>], iteration_bounds = array<i64: 2>, scalar_prefetch = 0 : i64, scratch_operands = 1 : i64, tpu.core_type = #tpu.core_type<tc>, window_params = [{transform_indices = @transform_0, window_bounds = array<i64: 8, 32>}, {pipeline_mode = #tpu.pipeline_mode<synchronous>, transform_indices = @transform_1, window_bounds = array<i64: 2, 32>}, {pipeline_mode = #tpu.pipeline_mode<synchronous>, transform_indices = @transform_2, window_bounds = array<i64: 32, 32>}, {pipeline_mode = #tpu.pipeline_mode<synchronous>, transform_indices = @transform_3, window_bounds = array<i64: 32, 32>}, {pipeline_mode = #tpu.pipeline_mode<synchronous>, transform_indices = @transform_4, window_bounds = array<i64: 32, 32>}, {pipeline_mode = #tpu.pipeline_mode<synchronous>, transform_indices = @transform_5, window_bounds = array<i64: 32, 32>}, {pipeline_mode = #tpu.pipeline_mode<synchronous>, transform_indices = @transform_6, window_bounds = array<i64: 32, 32>}, {pipeline_mode = #tpu.pipeline_mode<synchronous>, transform_indices = @transform_7, window_bounds = array<i64: 32, 32>}, {pipeline_mode = #tpu.pipeline_mode<synchronous>, transform_indices = @transform_8, window_bounds = array<i64: 1, 32>}, {pipeline_mode = #tpu.pipeline_mode<synchronous>, transform_indices = @transform_9, window_bounds = array<i64: 1, 32>}, {pipeline_mode = #tpu.pipeline_mode<synchronous>, transform_indices = @transform_10, window_bounds = array<i64: 1, 32>}, {pipeline_mode = #tpu.pipeline_mode<synchronous>, transform_indices = @transform_11, window_bounds = array<i64: 1, 32>}, {pipeline_mode = #tpu.pipeline_mode<synchronous>, transform_indices = @transform_12, window_bounds = array<i64: 32, 128>}, {pipeline_mode = #tpu.pipeline_mode<synchronous>, transform_indices = @transform_13, window_bounds = array<i64: 1, 128>}, {transform_indices = @transform_14, window_bounds = array<i64: 8, 128>}, {pipeline_mode = #tpu.pipeline_mode<synchronous>, transform_indices = @transform_15, window_bounds = array<i64: 2, 32>}]} {
    %c0_i32 = arith.constant 0 : i32
    %0 = arith.cmpi eq, %arg0, %c0_i32 : i32
    %1 = arith.extui %0 : i1 to i32
    %c0_i32_0 = arith.constant 0 : i32
    %2 = arith.cmpi ne, %1, %c0_i32_0 : i32
    scf.if %2 {
      %c0_62 = arith.constant 0 : index
      %c0_63 = arith.constant 0 : index
      %163 = vector.load %arg2[%c0_62, %c0_63] : memref<2x32xf32, #tpu.memory_space<vmem>>, vector<2x32xf32>
      %c0_64 = arith.constant 0 : index
      %c0_65 = arith.constant 0 : index
      %164 = vector.load %arg17[%c0_64, %c0_65] : memref<2x32xf32, #tpu.memory_space<vmem>>, vector<2x32xf32>
      tpu.vector_store %arg17[%c0_64, %c0_65], %163 {strides = array<i32>} : memref<2x32xf32, #tpu.memory_space<vmem>>, vector<2x32xf32>,
    } else {
    }
    %c0 = arith.constant 0 : index
    %c0_1 = arith.constant 0 : index
    %3 = vector.load %arg1[%c0, %c0_1] : memref<8x32xbf16, #tpu.memory_space<vmem>>, vector<8x32xbf16>
    %c0_2 = arith.constant 0 : index
    %c0_3 = arith.constant 0 : index
    %4 = vector.load %arg3[%c0_2, %c0_3] : memref<32x32xbf16, #tpu.memory_space<vmem>>, vector<32x32xbf16>
    %cst = arith.constant dense<0.000000e+00> : vector<8x32xf32>
    %5 = tpu.matmul %3, %4, %cst {dimension_numbers = #tpu.dot_dimension_numbers<[1], [0], [0], [1], [0, 0, 1, 1], [], []>} : vector<8x32xbf16>, vector<32x32xbf16>, vector<8x32xf32> -> vector<8x32xf32>
    %c0_4 = arith.constant 0 : index
    %c0_5 = arith.constant 0 : index
    %6 = vector.load %arg9[%c0_4, %c0_5] : memref<1x32xf32, #tpu.memory_space<vmem>>, vector<1x32xf32>
    %7 = vector.broadcast %6 : vector<1x32xf32> to vector<8x32xf32>
    %8 = arith.addf %5, %7 : vector<8x32xf32>
    %c0_6 = arith.constant 0 : index
    %c0_7 = arith.constant 0 : index
    %9 = vector.load %arg4[%c0_6, %c0_7] : memref<32x32xbf16, #tpu.memory_space<vmem>>, vector<32x32xbf16>
    %cst_8 = arith.constant dense<0.000000e+00> : vector<8x32xf32>
    %10 = tpu.matmul %3, %9, %cst_8 {dimension_numbers = #tpu.dot_dimension_numbers<[1], [0], [0], [1], [0, 0, 1, 1], [], []>} : vector<8x32xbf16>, vector<32x32xbf16>, vector<8x32xf32> -> vector<8x32xf32>
    %c0_9 = arith.constant 0 : index
    %c0_10 = arith.constant 0 : index
    %11 = vector.load %arg10[%c0_9, %c0_10] : memref<1x32xf32, #tpu.memory_space<vmem>>, vector<1x32xf32>
    %12 = vector.broadcast %11 : vector<1x32xf32> to vector<8x32xf32>
    %13 = arith.addf %10, %12 : vector<8x32xf32>
    %c0_11 = arith.constant 0 : index
    %c0_12 = arith.constant 0 : index
    %14 = vector.load %arg5[%c0_11, %c0_12] : memref<32x32xbf16, #tpu.memory_space<vmem>>, vector<32x32xbf16>
    %cst_13 = arith.constant dense<0.000000e+00> : vector<8x32xf32>
    %15 = tpu.matmul %3, %14, %cst_13 {dimension_numbers = #tpu.dot_dimension_numbers<[1], [0], [0], [1], [0, 0, 1, 1], [], []>} : vector<8x32xbf16>, vector<32x32xbf16>, vector<8x32xf32> -> vector<8x32xf32>
    %c0_14 = arith.constant 0 : index
    %c0_15 = arith.constant 0 : index
    %16 = vector.load %arg11[%c0_14, %c0_15] : memref<1x32xf32, #tpu.memory_space<vmem>>, vector<1x32xf32>
    %17 = vector.broadcast %16 : vector<1x32xf32> to vector<8x32xf32>
    %18 = arith.addf %15, %17 : vector<8x32xf32>
    %c0_16 = arith.constant 0 : index
    %c0_17 = arith.constant 0 : index
    %19 = vector.load %arg6[%c0_16, %c0_17] : memref<32x32xbf16, #tpu.memory_space<vmem>>, vector<32x32xbf16>
    %c0_18 = arith.constant 0 : index
    %c0_19 = arith.constant 0 : index
    %20 = vector.load %arg7[%c0_18, %c0_19] : memref<32x32xbf16, #tpu.memory_space<vmem>>, vector<32x32xbf16>
    %c0_20 = arith.constant 0 : index
    %c0_21 = arith.constant 0 : index
    %21 = vector.load %arg8[%c0_20, %c0_21] : memref<32x32xbf16, #tpu.memory_space<vmem>>, vector<32x32xbf16>
    %c0_22 = arith.constant 0 : index
    %c0_23 = arith.constant 0 : index
    %22 = vector.load %arg12[%c0_22, %c0_23] : memref<1x32xf32, #tpu.memory_space<vmem>>, vector<1x32xf32>
    %c0_24 = arith.constant 0 : index
    %c0_25 = arith.constant 0 : index
    %23 = vector.load %arg17[%c0_24, %c0_25] : memref<2x32xf32, #tpu.memory_space<vmem>>, vector<2x32xf32>
    %24 = arith.truncf %23 : vector<2x32xf32> to vector<2x32xbf16>
    %cst_26 = arith.constant dense<0.000000e+00> : vector<2x32xf32>
    %25 = tpu.matmul %24, %19, %cst_26 {dimension_numbers = #tpu.dot_dimension_numbers<[1], [0], [0], [1], [0, 0, 1, 1], [], []>} : vector<2x32xbf16>, vector<32x32xbf16>, vector<2x32xf32> -> vector<2x32xf32>
    %cst_27 = arith.constant dense<0.000000e+00> : vector<2x32xf32>
    %26 = tpu.matmul %24, %20, %cst_27 {dimension_numbers = #tpu.dot_dimension_numbers<[1], [0], [0], [1], [0, 0, 1, 1], [], []>} : vector<2x32xbf16>, vector<32x32xbf16>, vector<2x32xf32> -> vector<2x32xf32>
    %cst_28 = arith.constant dense<0.000000e+00> : vector<2x32xf32>
    %27 = tpu.matmul %24, %21, %cst_28 {dimension_numbers = #tpu.dot_dimension_numbers<[1], [0], [0], [1], [0, 0, 1, 1], [], []>} : vector<2x32xbf16>, vector<32x32xbf16>, vector<2x32xf32> -> vector<2x32xf32>
    %28 = vector.broadcast %22 : vector<1x32xf32> to vector<2x32xf32>
    %29 = arith.addf %27, %28 : vector<2x32xf32>
    %30 = vector.extract_strided_slice %8 {offsets = [0, 0], sizes = [2, 32], strides = [1, 1]} : vector<8x32xf32> to vector<2x32xf32>
    %31 = arith.addf %30, %25 : vector<2x32xf32>
    %32 = arith.negf %31 : vector<2x32xf32>
    %33 = math.exp %32 : vector<2x32xf32>
    %cst_29 = arith.constant 1.000000e+00 : f32
    %34 = vector.broadcast %cst_29 : f32 to vector<2x32xf32>
    %35 = arith.addf %34, %33 : vector<2x32xf32>
    %36 = arith.divf %34, %35 : vector<2x32xf32>
    %37 = vector.extract_strided_slice %13 {offsets = [0, 0], sizes = [2, 32], strides = [1, 1]} : vector<8x32xf32> to vector<2x32xf32>
    %38 = arith.addf %37, %26 : vector<2x32xf32>
    %39 = arith.negf %38 : vector<2x32xf32>
    %40 = math.exp %39 : vector<2x32xf32>
    %cst_30 = arith.constant 1.000000e+00 : f32
    %41 = vector.broadcast %cst_30 : f32 to vector<2x32xf32>
    %42 = arith.addf %41, %40 : vector<2x32xf32>
    %43 = arith.divf %41, %42 : vector<2x32xf32>
    %44 = vector.extract_strided_slice %18 {offsets = [0, 0], sizes = [2, 32], strides = [1, 1]} : vector<8x32xf32> to vector<2x32xf32>
    %45 = arith.mulf %36, %29 : vector<2x32xf32>
    %46 = arith.addf %44, %45 : vector<2x32xf32>
    %47 = math.tanh %46 : vector<2x32xf32>
    %cst_31 = arith.constant 1.000000e+00 : f32
    %48 = vector.broadcast %cst_31 : f32 to vector<2x32xf32>
    %49 = arith.subf %48, %43 : vector<2x32xf32>
    %50 = arith.mulf %49, %47 : vector<2x32xf32>
    %51 = arith.mulf %43, %23 : vector<2x32xf32>
    %52 = arith.addf %50, %51 : vector<2x32xf32>
    %53 = arith.truncf %52 : vector<2x32xf32> to vector<2x32xbf16>
    %cst_32 = arith.constant dense<0.000000e+00> : vector<2x32xf32>
    %54 = tpu.matmul %53, %19, %cst_32 {dimension_numbers = #tpu.dot_dimension_numbers<[1], [0], [0], [1], [0, 0, 1, 1], [], []>} : vector<2x32xbf16>, vector<32x32xbf16>, vector<2x32xf32> -> vector<2x32xf32>
    %cst_33 = arith.constant dense<0.000000e+00> : vector<2x32xf32>
    %55 = tpu.matmul %53, %20, %cst_33 {dimension_numbers = #tpu.dot_dimension_numbers<[1], [0], [0], [1], [0, 0, 1, 1], [], []>} : vector<2x32xbf16>, vector<32x32xbf16>, vector<2x32xf32> -> vector<2x32xf32>
    %cst_34 = arith.constant dense<0.000000e+00> : vector<2x32xf32>
    %56 = tpu.matmul %53, %21, %cst_34 {dimension_numbers = #tpu.dot_dimension_numbers<[1], [0], [0], [1], [0, 0, 1, 1], [], []>} : vector<2x32xbf16>, vector<32x32xbf16>, vector<2x32xf32> -> vector<2x32xf32>
    %57 = vector.broadcast %22 : vector<1x32xf32> to vector<2x32xf32>
    %58 = arith.addf %56, %57 : vector<2x32xf32>
    %59 = vector.extract_strided_slice %8 {offsets = [2, 0], sizes = [2, 32], strides = [1, 1]} : vector<8x32xf32> to vector<2x32xf32>
    %60 = arith.addf %59, %54 : vector<2x32xf32>
    %61 = arith.negf %60 : vector<2x32xf32>
    %62 = math.exp %61 : vector<2x32xf32>
    %cst_35 = arith.constant 1.000000e+00 : f32
    %63 = vector.broadcast %cst_35 : f32 to vector<2x32xf32>
    %64 = arith.addf %63, %62 : vector<2x32xf32>
    %65 = arith.divf %63, %64 : vector<2x32xf32>
    %66 = vector.extract_strided_slice %13 {offsets = [2, 0], sizes = [2, 32], strides = [1, 1]} : vector<8x32xf32> to vector<2x32xf32>
    %67 = arith.addf %66, %55 : vector<2x32xf32>
    %68 = arith.negf %67 : vector<2x32xf32>
    %69 = math.exp %68 : vector<2x32xf32>
    %cst_36 = arith.constant 1.000000e+00 : f32
    %70 = vector.broadcast %cst_36 : f32 to vector<2x32xf32>
    %71 = arith.addf %70, %69 : vector<2x32xf32>
    %72 = arith.divf %70, %71 : vector<2x32xf32>
    %73 = vector.extract_strided_slice %18 {offsets = [2, 0], sizes = [2, 32], strides = [1, 1]} : vector<8x32xf32> to vector<2x32xf32>
    %74 = arith.mulf %65, %58 : vector<2x32xf32>
    %75 = arith.addf %73, %74 : vector<2x32xf32>
    %76 = math.tanh %75 : vector<2x32xf32>
    %cst_37 = arith.constant 1.000000e+00 : f32
    %77 = vector.broadcast %cst_37 : f32 to vector<2x32xf32>
    %78 = arith.subf %77, %72 : vector<2x32xf32>
    %79 = arith.mulf %78, %76 : vector<2x32xf32>
    %80 = arith.mulf %72, %52 : vector<2x32xf32>
    %81 = arith.addf %79, %80 : vector<2x32xf32>
    %82 = arith.truncf %81 : vector<2x32xf32> to vector<2x32xbf16>
    %cst_38 = arith.constant dense<0.000000e+00> : vector<2x32xf32>
    %83 = tpu.matmul %82, %19, %cst_38 {dimension_numbers = #tpu.dot_dimension_numbers<[1], [0], [0], [1], [0, 0, 1, 1], [], []>} : vector<2x32xbf16>, vector<32x32xbf16>, vector<2x32xf32> -> vector<2x32xf32>
    %cst_39 = arith.constant dense<0.000000e+00> : vector<2x32xf32>
    %84 = tpu.matmul %82, %20, %cst_39 {dimension_numbers = #tpu.dot_dimension_numbers<[1], [0], [0], [1], [0, 0, 1, 1], [], []>} : vector<2x32xbf16>, vector<32x32xbf16>, vector<2x32xf32> -> vector<2x32xf32>
    %cst_40 = arith.constant dense<0.000000e+00> : vector<2x32xf32>
    %85 = tpu.matmul %82, %21, %cst_40 {dimension_numbers = #tpu.dot_dimension_numbers<[1], [0], [0], [1], [0, 0, 1, 1], [], []>} : vector<2x32xbf16>, vector<32x32xbf16>, vector<2x32xf32> -> vector<2x32xf32>
    %86 = vector.broadcast %22 : vector<1x32xf32> to vector<2x32xf32>
    %87 = arith.addf %85, %86 : vector<2x32xf32>
    %88 = vector.extract_strided_slice %8 {offsets = [4, 0], sizes = [2, 32], strides = [1, 1]} : vector<8x32xf32> to vector<2x32xf32>
    %89 = arith.addf %88, %83 : vector<2x32xf32>
    %90 = arith.negf %89 : vector<2x32xf32>
    %91 = math.exp %90 : vector<2x32xf32>
    %cst_41 = arith.constant 1.000000e+00 : f32
    %92 = vector.broadcast %cst_41 : f32 to vector<2x32xf32>
    %93 = arith.addf %92, %91 : vector<2x32xf32>
    %94 = arith.divf %92, %93 : vector<2x32xf32>
    %95 = vector.extract_strided_slice %13 {offsets = [4, 0], sizes = [2, 32], strides = [1, 1]} : vector<8x32xf32> to vector<2x32xf32>
    %96 = arith.addf %95, %84 : vector<2x32xf32>
    %97 = arith.negf %96 : vector<2x32xf32>
    %98 = math.exp %97 : vector<2x32xf32>
    %cst_42 = arith.constant 1.000000e+00 : f32
    %99 = vector.broadcast %cst_42 : f32 to vector<2x32xf32>
    %100 = arith.addf %99, %98 : vector<2x32xf32>
    %101 = arith.divf %99, %100 : vector<2x32xf32>
    %102 = vector.extract_strided_slice %18 {offsets = [4, 0], sizes = [2, 32], strides = [1, 1]} : vector<8x32xf32> to vector<2x32xf32>
    %103 = arith.mulf %94, %87 : vector<2x32xf32>
    %104 = arith.addf %102, %103 : vector<2x32xf32>
    %105 = math.tanh %104 : vector<2x32xf32>
    %cst_43 = arith.constant 1.000000e+00 : f32
    %106 = vector.broadcast %cst_43 : f32 to vector<2x32xf32>
    %107 = arith.subf %106, %101 : vector<2x32xf32>
    %108 = arith.mulf %107, %105 : vector<2x32xf32>
    %109 = arith.mulf %101, %81 : vector<2x32xf32>
    %110 = arith.addf %108, %109 : vector<2x32xf32>
    %111 = arith.truncf %110 : vector<2x32xf32> to vector<2x32xbf16>
    %cst_44 = arith.constant dense<0.000000e+00> : vector<2x32xf32>
    %112 = tpu.matmul %111, %19, %cst_44 {dimension_numbers = #tpu.dot_dimension_numbers<[1], [0], [0], [1], [0, 0, 1, 1], [], []>} : vector<2x32xbf16>, vector<32x32xbf16>, vector<2x32xf32> -> vector<2x32xf32>
    %cst_45 = arith.constant dense<0.000000e+00> : vector<2x32xf32>
    %113 = tpu.matmul %111, %20, %cst_45 {dimension_numbers = #tpu.dot_dimension_numbers<[1], [0], [0], [1], [0, 0, 1, 1], [], []>} : vector<2x32xbf16>, vector<32x32xbf16>, vector<2x32xf32> -> vector<2x32xf32>
    %cst_46 = arith.constant dense<0.000000e+00> : vector<2x32xf32>
    %114 = tpu.matmul %111, %21, %cst_46 {dimension_numbers = #tpu.dot_dimension_numbers<[1], [0], [0], [1], [0, 0, 1, 1], [], []>} : vector<2x32xbf16>, vector<32x32xbf16>, vector<2x32xf32> -> vector<2x32xf32>
    %115 = vector.broadcast %22 : vector<1x32xf32> to vector<2x32xf32>
    %116 = arith.addf %114, %115 : vector<2x32xf32>
    %117 = vector.extract_strided_slice %8 {offsets = [6, 0], sizes = [2, 32], strides = [1, 1]} : vector<8x32xf32> to vector<2x32xf32>
    %118 = arith.addf %117, %112 : vector<2x32xf32>
    %119 = arith.negf %118 : vector<2x32xf32>
    %120 = math.exp %119 : vector<2x32xf32>
    %cst_47 = arith.constant 1.000000e+00 : f32
    %121 = vector.broadcast %cst_47 : f32 to vector<2x32xf32>
    %122 = arith.addf %121, %120 : vector<2x32xf32>
    %123 = arith.divf %121, %122 : vector<2x32xf32>
    %124 = vector.extract_strided_slice %13 {offsets = [6, 0], sizes = [2, 32], strides = [1, 1]} : vector<8x32xf32> to vector<2x32xf32>
    %125 = arith.addf %124, %113 : vector<2x32xf32>
    %126 = arith.negf %125 : vector<2x32xf32>
    %127 = math.exp %126 : vector<2x32xf32>
    %cst_48 = arith.constant 1.000000e+00 : f32
    %128 = vector.broadcast %cst_48 : f32 to vector<2x32xf32>
    %129 = arith.addf %128, %127 : vector<2x32xf32>
    %130 = arith.divf %128, %129 : vector<2x32xf32>
    %131 = vector.extract_strided_slice %18 {offsets = [6, 0], sizes = [2, 32], strides = [1, 1]} : vector<8x32xf32> to vector<2x32xf32>
    %132 = arith.mulf %123, %116 : vector<2x32xf32>
    %133 = arith.addf %131, %132 : vector<2x32xf32>
    %134 = math.tanh %133 : vector<2x32xf32>
    %cst_49 = arith.constant 1.000000e+00 : f32
    %135 = vector.broadcast %cst_49 : f32 to vector<2x32xf32>
    %136 = arith.subf %135, %130 : vector<2x32xf32>
    %137 = arith.mulf %136, %134 : vector<2x32xf32>
    %138 = arith.mulf %130, %110 : vector<2x32xf32>
    %139 = arith.addf %137, %138 : vector<2x32xf32>
    %c0_50 = arith.constant 0 : index
    %c0_51 = arith.constant 0 : index
    %140 = vector.load %arg17[%c0_50, %c0_51] : memref<2x32xf32, #tpu.memory_space<vmem>>, vector<2x32xf32>
    tpu.vector_store %arg17[%c0_50, %c0_51], %139 {strides = array<i32>} : memref<2x32xf32, #tpu.memory_space<vmem>>, vector<2x32xf32>,
    %c1_i32 = arith.constant 1 : i32
    %141 = arith.cmpi eq, %arg0, %c1_i32 : i32
    %142 = arith.extui %141 : i1 to i32
    %c0_i32_52 = arith.constant 0 : i32
    %143 = arith.cmpi ne, %142, %c0_i32_52 : i32
    scf.if %143 {
      %c0_62 = arith.constant 0 : index
      %c0_63 = arith.constant 0 : index
      %163 = vector.load %arg16[%c0_62, %c0_63] : memref<2x32xf32, #tpu.memory_space<vmem>>, vector<2x32xf32>
      tpu.vector_store %arg16[%c0_62, %c0_63], %139 {strides = array<i32>} : memref<2x32xf32, #tpu.memory_space<vmem>>, vector<2x32xf32>,
    } else {
    }
    %144 = tpu.concatenate %52, %81, %110, %139 in 0 : vector<2x32xf32>, vector<2x32xf32>, vector<2x32xf32>, vector<2x32xf32> -> vector<8x32xf32>
    %145 = arith.truncf %144 : vector<8x32xf32> to vector<8x32xbf16>
    %c0_53 = arith.constant 0 : index
    %c0_54 = arith.constant 0 : index
    %146 = vector.load %arg13[%c0_53, %c0_54] : memref<32x128xbf16, #tpu.memory_space<vmem>>, vector<32x128xbf16>
    %cst_55 = arith.constant dense<0.000000e+00> : vector<8x128xf32>
    %147 = tpu.matmul %145, %146, %cst_55 {dimension_numbers = #tpu.dot_dimension_numbers<[1], [0], [0], [1], [0, 0, 1, 1], [], []>} : vector<8x32xbf16>, vector<32x128xbf16>, vector<8x128xf32> -> vector<8x128xf32>
    %c0_56 = arith.constant 0 : index
    %c0_57 = arith.constant 0 : index
    %148 = vector.load %arg14[%c0_56, %c0_57] : memref<1x128xf32, #tpu.memory_space<vmem>>, vector<1x128xf32>
    %149 = vector.broadcast %148 : vector<1x128xf32> to vector<8x128xf32>
    %150 = arith.addf %147, %149 : vector<8x128xf32>
    %cst_58 = arith.constant dense<0xFF800000> : vector<8xf32>
    %151 = vector.multi_reduction <maximumf>, %150, %cst_58 [1] : vector<8x128xf32> to vector<8xf32>
    %152 = vector.shape_cast %151 : vector<8xf32> to vector<8x1xf32>
    %153 = vector.broadcast %152 : vector<8x1xf32> to vector<8x128xf32>
    %154 = arith.subf %150, %153 : vector<8x128xf32>
    %155 = math.exp %154 : vector<8x128xf32>
    %cst_59 = arith.constant dense<0.000000e+00> : vector<8xf32>
    %156 = vector.multi_reduction <add>, %155, %cst_59 [1] : vector<8x128xf32> to vector<8xf32>
    %157 = vector.shape_cast %156 : vector<8xf32> to vector<8x1xf32>
    %158 = math.log %157 : vector<8x1xf32>
    %159 = arith.addf %152, %158 : vector<8x1xf32>
    %160 = vector.broadcast %159 : vector<8x1xf32> to vector<8x128xf32>
    %161 = arith.subf %150, %160 : vector<8x128xf32>
    %c0_60 = arith.constant 0 : index
    %c0_61 = arith.constant 0 : index
    %162 = vector.load %arg15[%c0_60, %c0_61] : memref<8x128xf32, #tpu.memory_space<vmem>>, vector<8x128xf32>
    tpu.vector_store %arg15[%c0_60, %c0_61], %161 {strides = array<i32>} : memref<8x128xf32, #tpu.memory_space<vmem>>, vector<8x128xf32>,
    return
  }
  func.func @transform_0(%arg0: i32) -> (i32, i32) {
    %c0_i32 = arith.constant 0 : i32
    %c0_i32_0 = arith.constant 0 : i32
    return %arg0, %c0_i32 : i32, i32
  }
  func.func @transform_1(%arg0: i32) -> (i32, i32) {
    %c0_i32 = arith.constant 0 : i32
    %c0_i32_0 = arith.constant 0 : i32
    %c0_i32_1 = arith.constant 0 : i32
    return %c0_i32, %c0_i32_0 : i32, i32
  }
  func.func @transform_2(%arg0: i32) -> (i32, i32) {
    %c0_i32 = arith.constant 0 : i32
    %c0_i32_0 = arith.constant 0 : i32
    %c0_i32_1 = arith.constant 0 : i32
    return %c0_i32, %c0_i32_0 : i32, i32
  }
  func.func @transform_3(%arg0: i32) -> (i32, i32) {
    %c0_i32 = arith.constant 0 : i32
    %c0_i32_0 = arith.constant 0 : i32
    %c0_i32_1 = arith.constant 0 : i32
    return %c0_i32, %c0_i32_0 : i32, i32
  }
  func.func @transform_4(%arg0: i32) -> (i32, i32) {
    %c0_i32 = arith.constant 0 : i32
    %c0_i32_0 = arith.constant 0 : i32
    %c0_i32_1 = arith.constant 0 : i32
    return %c0_i32, %c0_i32_0 : i32, i32
  }
  func.func @transform_5(%arg0: i32) -> (i32, i32) {
    %c0_i32 = arith.constant 0 : i32
    %c0_i32_0 = arith.constant 0 : i32
    %c0_i32_1 = arith.constant 0 : i32
    return %c0_i32, %c0_i32_0 : i32, i32
  }
  func.func @transform_6(%arg0: i32) -> (i32, i32) {
    %c0_i32 = arith.constant 0 : i32
    %c0_i32_0 = arith.constant 0 : i32
    %c0_i32_1 = arith.constant 0 : i32
    return %c0_i32, %c0_i32_0 : i32, i32
  }
  func.func @transform_7(%arg0: i32) -> (i32, i32) {
    %c0_i32 = arith.constant 0 : i32
    %c0_i32_0 = arith.constant 0 : i32
    %c0_i32_1 = arith.constant 0 : i32
    return %c0_i32, %c0_i32_0 : i32, i32
  }
  func.func @transform_8(%arg0: i32) -> (i32, i32) {
    %c0_i32 = arith.constant 0 : i32
    %c0_i32_0 = arith.constant 0 : i32
    %c0_i32_1 = arith.constant 0 : i32
    return %c0_i32, %c0_i32_0 : i32, i32
  }
  func.func @transform_9(%arg0: i32) -> (i32, i32) {
    %c0_i32 = arith.constant 0 : i32
    %c0_i32_0 = arith.constant 0 : i32
    %c0_i32_1 = arith.constant 0 : i32
    return %c0_i32, %c0_i32_0 : i32, i32
  }
  func.func @transform_10(%arg0: i32) -> (i32, i32) {
    %c0_i32 = arith.constant 0 : i32
    %c0_i32_0 = arith.constant 0 : i32
    %c0_i32_1 = arith.constant 0 : i32
    return %c0_i32, %c0_i32_0 : i32, i32
  }
  func.func @transform_11(%arg0: i32) -> (i32, i32) {
    %c0_i32 = arith.constant 0 : i32
    %c0_i32_0 = arith.constant 0 : i32
    %c0_i32_1 = arith.constant 0 : i32
    return %c0_i32, %c0_i32_0 : i32, i32
  }
  func.func @transform_12(%arg0: i32) -> (i32, i32) {
    %c0_i32 = arith.constant 0 : i32
    %c0_i32_0 = arith.constant 0 : i32
    %c0_i32_1 = arith.constant 0 : i32
    return %c0_i32, %c0_i32_0 : i32, i32
  }
  func.func @transform_13(%arg0: i32) -> (i32, i32) {
    %c0_i32 = arith.constant 0 : i32
    %c0_i32_0 = arith.constant 0 : i32
    %c0_i32_1 = arith.constant 0 : i32
    return %c0_i32, %c0_i32_0 : i32, i32
  }
  func.func @transform_14(%arg0: i32) -> (i32, i32) {
    %c0_i32 = arith.constant 0 : i32
    %c0_i32_0 = arith.constant 0 : i32
    return %arg0, %c0_i32 : i32, i32
  }
  func.func @transform_15(%arg0: i32) -> (i32, i32) {
    %c0_i32 = arith.constant 0 : i32
    %c0_i32_0 = arith.constant 0 : i32
    %c0_i32_1 = arith.constant 0 : i32
    return %c0_i32, %c0_i32_0 : i32, i32
  }
}

</mosaic_0001>

<llo_original>
// kernel: gru_model_forward.1
$region0: #{gru_model_forward.1}
  #allocation0 [shape = 'u32[]', space=smem, size = 0x4, offset = 0x4, fixed_abs, tag = 'smem constant byte address 0x4 - core index']
  #allocation1 [shape = 'u32[144,128]{1,0:T(1,128)}', space=vmem, size = 0x12000, scoped, tag = 'internal scratch']
  #allocation2 [shape = 'f32[2,32]{1,0:T(2,128)}', space=vmem, size = 0x400, scoped, tag = 'scratch operand']
  %s0 = inlined_call_operand.vmem [shape: bf16[16,32], index: 0, kind: input, shape index: {}]
  %s1 = inlined_call_operand.vmem [shape: f32[2,32], index: 1, kind: input, shape index: {}]
  %s2 = inlined_call_operand.vmem [shape: bf16[32,32], index: 2, kind: input, shape index: {}]
  %s3 = inlined_call_operand.vmem [shape: bf16[32,32], index: 3, kind: input, shape index: {}]
  %s4 = inlined_call_operand.vmem [shape: bf16[32,32], index: 4, kind: input, shape index: {}]
  %s5 = inlined_call_operand.vmem [shape: bf16[32,32], index: 5, kind: input, shape index: {}]
  %s6 = inlined_call_operand.vmem [shape: bf16[32,32], index: 6, kind: input, shape index: {}]
  %s7 = inlined_call_operand.vmem [shape: bf16[32,32], index: 7, kind: input, shape index: {}]
  %s8 = inlined_call_operand.vmem [shape: f32[1,32], index: 8, kind: input, shape index: {}]
  %s9 = inlined_call_operand.vmem [shape: f32[1,32], index: 9, kind: input, shape index: {}]
  %s10 = inlined_call_operand.vmem [shape: f32[1,32], index: 10, kind: input, shape index: {}]
  %s11 = inlined_call_operand.vmem [shape: f32[1,32], index: 11, kind: input, shape index: {}]
  %s12 = inlined_call_operand.vmem [shape: bf16[32,128], index: 12, kind: input, shape index: {}]
  %s13 = inlined_call_operand.vmem [shape: f32[1,128], index: 13, kind: input, shape index: {}]
  %s14 = inlined_call_operand.vmem [shape: f32[16,128], index: 14, kind: output, shape index: {0}]
  %s15 = inlined_call_operand.hbm [shape: f32[2,32], index: 15, kind: output, shape index: {1}]
  %16 = xla_tuple %s14, %s15
  %s17 = sld [smem:[#allocation0]]
  $region105: #{gru_model_forward.1} parent=0
    _
  %s19 = ssub.s32 1, %s17
  %s20 = scalar_select 0, %s19, %s17
  $region1: #{gru_model_forward.1} parent=0
    #allocation3 [shape = 'u8[1024]{0}', space=vmem, size = 0x400, scoped, tag = 'output window, operand 1, single buffered']
    #allocation4 [shape = 's32[2]{0}', space=sflag, size = 0x8, scoped, tag = 'scoped memory for gru_model_forward.1']
    %21 = vsyncpa [#allocation4], 0
    loop: start=0, step=1, limit=4
    $region2: #{gru_model_forward.1} parent=1 // loop_pre_header
      _
    $region3: #{gru_model_forward.1} parent=1 // loop_header
      %s23 = sphi 0, %s27
      %p24 = scmp.ge.s32.totalorder %s23, 4
      %s33 = sphi 0, %s35
      %s36 = sphi 0, %s33
      %s37 = sphi 0, %s36
      %s53 = sphi 0, %s37
      %s57 = sphi 0, %s57
      %s59 = sphi 0, %s57
      %s60 = sphi 0, %s59
      %s74 = sphi 0, %s60
      %s78 = sphi 0, %s78
      %s80 = sphi 0, %s78
      %s81 = sphi 0, %s80
      %s95 = sphi 0, %s81
      %s99 = sphi 0, %s99
      %s101 = sphi 0, %s99
      %s102 = sphi 0, %s101
      %s116 = sphi 0, %s102
      %s120 = sphi 0, %s120
      %s122 = sphi 0, %s120
      %s123 = sphi 0, %s122
      %s137 = sphi 0, %s123
      %s141 = sphi 0, %s141
      %s143 = sphi 0, %s141
      %s144 = sphi 0, %s143
      %s158 = sphi 0, %s144
      %s162 = sphi 0, %s162
      %s164 = sphi 0, %s162
      %s165 = sphi 0, %s164
      %s179 = sphi 0, %s165
      %s183 = sphi 0, %s183
      %s185 = sphi 0, %s183
      %s186 = sphi 0, %s185
      %s200 = sphi 0, %s186
      %s204 = sphi 0, %s204
      %s206 = sphi 0, %s204
      %s207 = sphi 0, %s206
      %s221 = sphi 0, %s207
      %s225 = sphi 0, %s225
      %s227 = sphi 0, %s225
      %s228 = sphi 0, %s227
      %s242 = sphi 0, %s228
      %s246 = sphi 0, %s246
      %s248 = sphi 0, %s246
      %s249 = sphi 0, %s248
      %s263 = sphi 0, %s249
      %s267 = sphi 0, %s267
      %s269 = sphi 0, %s267
      %s270 = sphi 0, %s269
      %s284 = sphi 0, %s270
      %s288 = sphi 0, %s288
      %s290 = sphi 0, %s288
      %s291 = sphi 0, %s290
      %s305 = sphi 0, %s291
      %s309 = sphi 0, %s309
      %s311 = sphi 0, %s309
      %s312 = sphi 0, %s311
      %s326 = sphi 0, %s312
      %s332 = sphi 0, %s334
      %s335 = sphi 0, %s332
      %s336 = sphi 0, %s335
      %s352 = sphi 0, %s336
      %s356 = sphi 0, %s356
      %s358 = sphi 0, %s356
      %s359 = sphi 0, %s358
      %s373 = sphi 0, %s359
    $region4: #{gru_model_forward.1} parent=1 // loop_header_branch
      %26 = sbr.rel (%p24) target = $region8
    $region5: #{gru_model_forward.1} parent=1 // loop_body
      %s28 = ssub.s32 %s23, 1
      %s29 = ssub.s32 %s23, 2
      %s30 = sadd.s32 %s23, 1
      %s31 = ssub.s32 %s23, %s30
      %p32 = scmp.eq.s32.totalorder %s31, 0
      %s34 = sadd.s32 %s33, 1
      %s35 = scalar_select %p32, %s33, %s34
      %p38 = pneg %p32
      %p39 = scmp.eq.s32.totalorder %s23, 1
      %p40 = por %p38, %p39
      %p41 = scmp.ne.s32.totalorder %s33, %s36
      %p42 = scmp.eq.s32.totalorder %s23, 0
      %p43 = por %p41, %p42
      %p44 = scmp.ne.s32.totalorder %s33, %s36
      %p45 = scmp.eq.s32.totalorder %s28, 1
      %p46 = por %p44, %p45
      %p47 = scmp.ne.s32.totalorder %s36, %s37
      %p48 = scmp.eq.s32.totalorder %s28, 0
      %p49 = por %p47, %p48
      %p50 = scmp.ne.s32.totalorder %s36, %s37
      %p51 = scmp.eq.s32.totalorder %s29, 1
      %p52 = por %p50, %p51
      %p54 = scmp.ne.s32.totalorder %s37, %s53
      %p55 = scmp.eq.s32.totalorder %s29, 0
      %p56 = por %p54, %p55
      %s58 = sadd.s32 %s57, 1
      %p61 = scmp.eq.s32.totalorder %s23, 1
      %p62 = scmp.ne.s32.totalorder %s57, %s59
      %p63 = scmp.eq.s32.totalorder %s23, 0
      %p64 = por %p62, %p63
      %p65 = scmp.ne.s32.totalorder %s57, %s59
      %p66 = scmp.eq.s32.totalorder %s28, 1
      %p67 = por %p65, %p66
      %p68 = scmp.ne.s32.totalorder %s59, %s60
      %p69 = scmp.eq.s32.totalorder %s28, 0
      %p70 = por %p68, %p69
      %p71 = scmp.ne.s32.totalorder %s59, %s60
      %p72 = scmp.eq.s32.totalorder %s29, 1
      %p73 = por %p71, %p72
      %p75 = scmp.ne.s32.totalorder %s60, %s74
      %p76 = scmp.eq.s32.totalorder %s29, 0
      %p77 = por %p75, %p76
      %s79 = sadd.s32 %s78, 1
      %p82 = scmp.eq.s32.totalorder %s23, 1
      %p83 = scmp.ne.s32.totalorder %s78, %s80
      %p84 = scmp.eq.s32.totalorder %s23, 0
      %p85 = por %p83, %p84
      %p86 = scmp.ne.s32.totalorder %s78, %s80
      %p87 = scmp.eq.s32.totalorder %s28, 1
      %p88 = por %p86, %p87
      %p89 = scmp.ne.s32.totalorder %s80, %s81
      %p90 = scmp.eq.s32.totalorder %s28, 0
      %p91 = por %p89, %p90
      %p92 = scmp.ne.s32.totalorder %s80, %s81
      %p93 = scmp.eq.s32.totalorder %s29, 1
      %p94 = por %p92, %p93
      %p96 = scmp.ne.s32.totalorder %s81, %s95
      %p97 = scmp.eq.s32.totalorder %s29, 0
      %p98 = por %p96, %p97
      %s100 = sadd.s32 %s99, 1
      %p103 = scmp.eq.s32.totalorder %s23, 1
      %p104 = scmp.ne.s32.totalorder %s99, %s101
      %p105 = scmp.eq.s32.totalorder %s23, 0
      %p106 = por %p104, %p105
      %p107 = scmp.ne.s32.totalorder %s99, %s101
      %p108 = scmp.eq.s32.totalorder %s28, 1
      %p109 = por %p107, %p108
      %p110 = scmp.ne.s32.totalorder %s101, %s102
      %p111 = scmp.eq.s32.totalorder %s28, 0
      %p112 = por %p110, %p111
      %p113 = scmp.ne.s32.totalorder %s101, %s102
      %p114 = scmp.eq.s32.totalorder %s29, 1
      %p115 = por %p113, %p114
      %p117 = scmp.ne.s32.totalorder %s102, %s116
      %p118 = scmp.eq.s32.totalorder %s29, 0
      %p119 = por %p117, %p118
      %s121 = sadd.s32 %s120, 1
      %p124 = scmp.eq.s32.totalorder %s23, 1
      %p125 = scmp.ne.s32.totalorder %s120, %s122
      %p126 = scmp.eq.s32.totalorder %s23, 0
      %p127 = por %p125, %p126
      %p128 = scmp.ne.s32.totalorder %s120, %s122
      %p129 = scmp.eq.s32.totalorder %s28, 1
      %p130 = por %p128, %p129
      %p131 = scmp.ne.s32.totalorder %s122, %s123
      %p132 = scmp.eq.s32.totalorder %s28, 0
      %p133 = por %p131, %p132
      %p134 = scmp.ne.s32.totalorder %s122, %s123
      %p135 = scmp.eq.s32.totalorder %s29, 1
      %p136 = por %p134, %p135
      %p138 = scmp.ne.s32.totalorder %s123, %s137
      %p139 = scmp.eq.s32.totalorder %s29, 0
      %p140 = por %p138, %p139
      %s142 = sadd.s32 %s141, 1
      %p145 = scmp.eq.s32.totalorder %s23, 1
      %p146 = scmp.ne.s32.totalorder %s141, %s143
      %p147 = scmp.eq.s32.totalorder %s23, 0
      %p148 = por %p146, %p147
      %p149 = scmp.ne.s32.totalorder %s141, %s143
      %p150 = scmp.eq.s32.totalorder %s28, 1
      %p151 = por %p149, %p150
      %p152 = scmp.ne.s32.totalorder %s143, %s144
      %p153 = scmp.eq.s32.totalorder %s28, 0
      %p154 = por %p152, %p153
      %p155 = scmp.ne.s32.totalorder %s143, %s144
      %p156 = scmp.eq.s32.totalorder %s29, 1
      %p157 = por %p155, %p156
      %p159 = scmp.ne.s32.totalorder %s144, %s158
      %p160 = scmp.eq.s32.totalorder %s29, 0
      %p161 = por %p159, %p160
      %s163 = sadd.s32 %s162, 1
      %p166 = scmp.eq.s32.totalorder %s23, 1
      %p167 = scmp.ne.s32.totalorder %s162, %s164
      %p168 = scmp.eq.s32.totalorder %s23, 0
      %p169 = por %p167, %p168
      %p170 = scmp.ne.s32.totalorder %s162, %s164
      %p171 = scmp.eq.s32.totalorder %s28, 1
      %p172 = por %p170, %p171
      %p173 = scmp.ne.s32.totalorder %s164, %s165
      %p174 = scmp.eq.s32.totalorder %s28, 0
      %p175 = por %p173, %p174
      %p176 = scmp.ne.s32.totalorder %s164, %s165
      %p177 = scmp.eq.s32.totalorder %s29, 1
      %p178 = por %p176, %p177
      %p180 = scmp.ne.s32.totalorder %s165, %s179
      %p181 = scmp.eq.s32.totalorder %s29, 0
      %p182 = por %p180, %p181
      %s184 = sadd.s32 %s183, 1
      %p187 = scmp.eq.s32.totalorder %s23, 1
      %p188 = scmp.ne.s32.totalorder %s183, %s185
      %p189 = scmp.eq.s32.totalorder %s23, 0
      %p190 = por %p188, %p189
      %p191 = scmp.ne.s32.totalorder %s183, %s185
      %p192 = scmp.eq.s32.totalorder %s28, 1
      %p193 = por %p191, %p192
      %p194 = scmp.ne.s32.totalorder %s185, %s186
      %p195 = scmp.eq.s32.totalorder %s28, 0
      %p196 = por %p194, %p195
      %p197 = scmp.ne.s32.totalorder %s185, %s186
      %p198 = scmp.eq.s32.totalorder %s29, 1
      %p199 = por %p197, %p198
      %p201 = scmp.ne.s32.totalorder %s186, %s200
      %p202 = scmp.eq.s32.totalorder %s29, 0
      %p203 = por %p201, %p202
      %s205 = sadd.s32 %s204, 1
      %p208 = scmp.eq.s32.totalorder %s23, 1
      %p209 = scmp.ne.s32.totalorder %s204, %s206
      %p210 = scmp.eq.s32.totalorder %s23, 0
      %p211 = por %p209, %p210
      %p212 = scmp.ne.s32.totalorder %s204, %s206
      %p213 = scmp.eq.s32.totalorder %s28, 1
      %p214 = por %p212, %p213
      %p215 = scmp.ne.s32.totalorder %s206, %s207
      %p216 = scmp.eq.s32.totalorder %s28, 0
      %p217 = por %p215, %p216
      %p218 = scmp.ne.s32.totalorder %s206, %s207
      %p219 = scmp.eq.s32.totalorder %s29, 1
      %p220 = por %p218, %p219
      %p222 = scmp.ne.s32.totalorder %s207, %s221
      %p223 = scmp.eq.s32.totalorder %s29, 0
      %p224 = por %p222, %p223
      %s226 = sadd.s32 %s225, 1
      %p229 = scmp.eq.s32.totalorder %s23, 1
      %p230 = scmp.ne.s32.totalorder %s225, %s227
      %p231 = scmp.eq.s32.totalorder %s23, 0
      %p232 = por %p230, %p231
      %p233 = scmp.ne.s32.totalorder %s225, %s227
      %p234 = scmp.eq.s32.totalorder %s28, 1
      %p235 = por %p233, %p234
      %p236 = scmp.ne.s32.totalorder %s227, %s228
      %p237 = scmp.eq.s32.totalorder %s28, 0
      %p238 = por %p236, %p237
      %p239 = scmp.ne.s32.totalorder %s227, %s228
      %p240 = scmp.eq.s32.totalorder %s29, 1
      %p241 = por %p239, %p240
      %p243 = scmp.ne.s32.totalorder %s228, %s242
      %p244 = scmp.eq.s32.totalorder %s29, 0
      %p245 = por %p243, %p244
      %s247 = sadd.s32 %s246, 1
      %p250 = scmp.eq.s32.totalorder %s23, 1
      %p251 = scmp.ne.s32.totalorder %s246, %s248
      %p252 = scmp.eq.s32.totalorder %s23, 0
      %p253 = por %p251, %p252
      %p254 = scmp.ne.s32.totalorder %s246, %s248
      %p255 = scmp.eq.s32.totalorder %s28, 1
      %p256 = por %p254, %p255
      %p257 = scmp.ne.s32.totalorder %s248, %s249
      %p258 = scmp.eq.s32.totalorder %s28, 0
      %p259 = por %p257, %p258
      %p260 = scmp.ne.s32.totalorder %s248, %s249
      %p261 = scmp.eq.s32.totalorder %s29, 1
      %p262 = por %p260, %p261
      %p264 = scmp.ne.s32.totalorder %s249, %s263
      %p265 = scmp.eq.s32.totalorder %s29, 0
      %p266 = por %p264, %p265
      %s268 = sadd.s32 %s267, 1
      %p271 = scmp.eq.s32.totalorder %s23, 1
      %p272 = scmp.ne.s32.totalorder %s267, %s269
      %p273 = scmp.eq.s32.totalorder %s23, 0
      %p274 = por %p272, %p273
      %p275 = scmp.ne.s32.totalorder %s267, %s269
      %p276 = scmp.eq.s32.totalorder %s28, 1
      %p277 = por %p275, %p276
      %p278 = scmp.ne.s32.totalorder %s269, %s270
      %p279 = scmp.eq.s32.totalorder %s28, 0
      %p280 = por %p278, %p279
      %p281 = scmp.ne.s32.totalorder %s269, %s270
      %p282 = scmp.eq.s32.totalorder %s29, 1
      %p283 = por %p281, %p282
      %p285 = scmp.ne.s32.totalorder %s270, %s284
      %p286 = scmp.eq.s32.totalorder %s29, 0
      %p287 = por %p285, %p286
      %s289 = sadd.s32 %s288, 1
      %p292 = scmp.eq.s32.totalorder %s23, 1
      %p293 = scmp.ne.s32.totalorder %s288, %s290
      %p294 = scmp.eq.s32.totalorder %s23, 0
      %p295 = por %p293, %p294
      %p296 = scmp.ne.s32.totalorder %s288, %s290
      %p297 = scmp.eq.s32.totalorder %s28, 1
      %p298 = por %p296, %p297
      %p299 = scmp.ne.s32.totalorder %s290, %s291
      %p300 = scmp.eq.s32.totalorder %s28, 0
      %p301 = por %p299, %p300
      %p302 = scmp.ne.s32.totalorder %s290, %s291
      %p303 = scmp.eq.s32.totalorder %s29, 1
      %p304 = por %p302, %p303
      %p306 = scmp.ne.s32.totalorder %s291, %s305
      %p307 = scmp.eq.s32.totalorder %s29, 0
      %p308 = por %p306, %p307
      %s310 = sadd.s32 %s309, 1
      %p313 = scmp.eq.s32.totalorder %s23, 1
      %p314 = scmp.ne.s32.totalorder %s309, %s311
      %p315 = scmp.eq.s32.totalorder %s23, 0
      %p316 = por %p314, %p315
      %p317 = scmp.ne.s32.totalorder %s309, %s311
      %p318 = scmp.eq.s32.totalorder %s28, 1
      %p319 = por %p317, %p318
      %p320 = scmp.ne.s32.totalorder %s311, %s312
      %p321 = scmp.eq.s32.totalorder %s28, 0
      %p322 = por %p320, %p321
      %p323 = scmp.ne.s32.totalorder %s311, %s312
      %p324 = scmp.eq.s32.totalorder %s29, 1
      %p325 = por %p323, %p324
      %p327 = scmp.ne.s32.totalorder %s312, %s326
      %p328 = scmp.eq.s32.totalorder %s29, 0
      %p329 = por %p327, %p328
      %s330 = ssub.s32 %s23, %s30
      %p331 = scmp.eq.s32.totalorder %s330, 0
      %s333 = sadd.s32 %s332, 1
      %s334 = scalar_select %p331, %s332, %s333
      %p337 = pneg %p331
      %p338 = scmp.eq.s32.totalorder %s23, 1
      %p339 = por %p337, %p338
      %p340 = scmp.ne.s32.totalorder %s332, %s335
      %p341 = scmp.eq.s32.totalorder %s23, 0
      %p342 = por %p340, %p341
      %p343 = scmp.ne.s32.totalorder %s332, %s335
      %p344 = scmp.eq.s32.totalorder %s28, 1
      %p345 = por %p343, %p344
      %p346 = scmp.ne.s32.totalorder %s335, %s336
      %p347 = scmp.eq.s32.totalorder %s28, 0
      %p348 = por %p346, %p347
      %p349 = scmp.ne.s32.totalorder %s335, %s336
      %p350 = scmp.eq.s32.totalorder %s29, 1
      %p351 = por %p349, %p350
      %p353 = scmp.ne.s32.totalorder %s336, %s352
      %p354 = scmp.eq.s32.totalorder %s29, 0
      %p355 = por %p353, %p354
      %s357 = sadd.s32 %s356, 1
      %p360 = scmp.eq.s32.totalorder %s23, 1
      %p361 = scmp.ne.s32.totalorder %s356, %s358
      %p362 = scmp.eq.s32.totalorder %s23, 0
      %p363 = por %p361, %p362
      %p364 = scmp.ne.s32.totalorder %s356, %s358
      %p365 = scmp.eq.s32.totalorder %s28, 1
      %p366 = por %p364, %p365
      %p367 = scmp.ne.s32.totalorder %s358, %s359
      %p368 = scmp.eq.s32.totalorder %s28, 0
      %p369 = por %p367, %p368
      %p370 = scmp.ne.s32.totalorder %s358, %s359
      %p371 = scmp.eq.s32.totalorder %s29, 1
      %p372 = por %p370, %p371
      %p374 = scmp.ne.s32.totalorder %s359, %s373
      %p375 = scmp.eq.s32.totalorder %s29, 0
      %p376 = por %p374, %p375
      %p377 = scmp.le.s32.totalorder 1, %s23
      %p378 = scmp.lt.s32.totalorder %s23, 3
      %p379 = pnand %p377, %p378
      %p380 = pneg %p379
      // Predicated region
      $region9: #{gru_model_forward.1} parent=5 // pred_check
        _
      $region10: #{gru_model_forward.1} parent=5 // pred_check_branch
        %382 = sbr.rel (%p379) target = $region12
      $region11: #{gru_model_forward.1} parent=5 // pred_region
        %s383 = ssub.s32 %s23, 1
        // Predicated region
        $region13: #{gru_model_forward.1} parent=11 // pred_check
          %p384 = pneg %p70
        $region14: #{gru_model_forward.1} parent=11 // pred_check_branch
          %386 = sbr.rel (%p384) target = $region16
        $region15: #{gru_model_forward.1} parent=11 // pred_region
          _
        $region16: #{gru_model_forward.1} parent=11 // pred_fallthru
          _
        // Predicated region
        $region17: #{gru_model_forward.1} parent=11 // pred_check
          %p387 = pneg %p91
        $region18: #{gru_model_forward.1} parent=11 // pred_check_branch
          %389 = sbr.rel (%p387) target = $region20
        $region19: #{gru_model_forward.1} parent=11 // pred_region
          _
        $region20: #{gru_model_forward.1} parent=11 // pred_fallthru
          _
        // Predicated region
        $region21: #{gru_model_forward.1} parent=11 // pred_check
          %p390 = pneg %p112
        $region22: #{gru_model_forward.1} parent=11 // pred_check_branch
          %392 = sbr.rel (%p390) target = $region24
        $region23: #{gru_model_forward.1} parent=11 // pred_region
          _
        $region24: #{gru_model_forward.1} parent=11 // pred_fallthru
          _
        // Predicated region
        $region25: #{gru_model_forward.1} parent=11 // pred_check
          %p393 = pneg %p133
        $region26: #{gru_model_forward.1} parent=11 // pred_check_branch
          %395 = sbr.rel (%p393) target = $region28
        $region27: #{gru_model_forward.1} parent=11 // pred_region
          _
        $region28: #{gru_model_forward.1} parent=11 // pred_fallthru
          _
        // Predicated region
        $region29: #{gru_model_forward.1} parent=11 // pred_check
          %p396 = pneg %p154
        $region30: #{gru_model_forward.1} parent=11 // pred_check_branch
          %398 = sbr.rel (%p396) target = $region32
        $region31: #{gru_model_forward.1} parent=11 // pred_region
          _
        $region32: #{gru_model_forward.1} parent=11 // pred_fallthru
          _
        // Predicated region
        $region33: #{gru_model_forward.1} parent=11 // pred_check
          %p399 = pneg %p175
        $region34: #{gru_model_forward.1} parent=11 // pred_check_branch
          %401 = sbr.rel (%p399) target = $region36
        $region35: #{gru_model_forward.1} parent=11 // pred_region
          _
        $region36: #{gru_model_forward.1} parent=11 // pred_fallthru
          _
        // Predicated region
        $region37: #{gru_model_forward.1} parent=11 // pred_check
          %p402 = pneg %p196
        $region38: #{gru_model_forward.1} parent=11 // pred_check_branch
          %404 = sbr.rel (%p402) target = $region40
        $region39: #{gru_model_forward.1} parent=11 // pred_region
          _
        $region40: #{gru_model_forward.1} parent=11 // pred_fallthru
          _
        // Predicated region
        $region41: #{gru_model_forward.1} parent=11 // pred_check
          %p405 = pneg %p217
        $region42: #{gru_model_forward.1} parent=11 // pred_check_branch
          %407 = sbr.rel (%p405) target = $region44
        $region43: #{gru_model_forward.1} parent=11 // pred_region
          _
        $region44: #{gru_model_forward.1} parent=11 // pred_fallthru
          _
        // Predicated region
        $region45: #{gru_model_forward.1} parent=11 // pred_check
          %p408 = pneg %p238
        $region46: #{gru_model_forward.1} parent=11 // pred_check_branch
          %410 = sbr.rel (%p408) target = $region48
        $region47: #{gru_model_forward.1} parent=11 // pred_region
          _
        $region48: #{gru_model_forward.1} parent=11 // pred_fallthru
          _
        // Predicated region
        $region49: #{gru_model_forward.1} parent=11 // pred_check
          %p411 = pneg %p259
        $region50: #{gru_model_forward.1} parent=11 // pred_check_branch
          %413 = sbr.rel (%p411) target = $region52
        $region51: #{gru_model_forward.1} parent=11 // pred_region
          _
        $region52: #{gru_model_forward.1} parent=11 // pred_fallthru
          _
        // Predicated region
        $region53: #{gru_model_forward.1} parent=11 // pred_check
          %p414 = pneg %p280
        $region54: #{gru_model_forward.1} parent=11 // pred_check_branch
          %416 = sbr.rel (%p414) target = $region56
        $region55: #{gru_model_forward.1} parent=11 // pred_region
          _
        $region56: #{gru_model_forward.1} parent=11 // pred_fallthru
          _
        // Predicated region
        $region57: #{gru_model_forward.1} parent=11 // pred_check
          %p417 = pneg %p301
        $region58: #{gru_model_forward.1} parent=11 // pred_check_branch
          %419 = sbr.rel (%p417) target = $region60
        $region59: #{gru_model_forward.1} parent=11 // pred_region
          _
        $region60: #{gru_model_forward.1} parent=11 // pred_fallthru
          _
        // Predicated region
        $region61: #{gru_model_forward.1} parent=11 // pred_check
          %p420 = pneg %p322
        $region62: #{gru_model_forward.1} parent=11 // pred_check_branch
          %422 = sbr.rel (%p420) target = $region64
        $region63: #{gru_model_forward.1} parent=11 // pred_region
          _
        $region64: #{gru_model_forward.1} parent=11 // pred_fallthru
          _
      $region12: #{gru_model_forward.1} parent=5 // pred_fallthru
        _
      %p423 = scmp.lt.s32.totalorder %s23, 2
      // Predicated region
      $region65: #{gru_model_forward.1} parent=5 // pred_check
        %p424 = pneg %p423
      $region66: #{gru_model_forward.1} parent=5 // pred_check_branch
        %426 = sbr.rel (%p424) target = $region68
      $region67: #{gru_model_forward.1} parent=5 // pred_region
        // Predicated region
        $region69: #{gru_model_forward.1} parent=67 // pred_check
          %p427 = pneg %p43
        $region70: #{gru_model_forward.1} parent=67 // pred_check_branch
          %429 = sbr.rel (%p427) target = $region72
        $region71: #{gru_model_forward.1} parent=67 // pred_region
          %p430 = scmp.lt.s32.totalorder %s23, 1
          %s431 = scalar_select %p430, %s23, 1
          %s432 = smul.addr %s431, 4
          %s433 = scalar_lea.vmem %s0, %s432
        $region72: #{gru_model_forward.1} parent=67 // pred_fallthru
          _
      $region68: #{gru_model_forward.1} parent=5 // pred_fallthru
        _
      %p434 = scmp.le.s32.totalorder 1, %s23
      %p435 = scmp.lt.s32.totalorder %s23, 3
      %p436 = pnand %p434, %p435
      %p437 = pneg %p436
      // Predicated region
      $region73: #{gru_model_forward.1} parent=5 // pred_check
        _
      $region74: #{gru_model_forward.1} parent=5 // pred_check_branch
        %439 = sbr.rel (%p436) target = $region76
      $region75: #{gru_model_forward.1} parent=5 // pred_region
        %s440 = ssub.s32 %s23, 1
        %p441 = scmp.lt.s32.totalorder %s28, 1
        %s442 = scalar_select %p441, %s28, 1
        %s443 = smul.addr %s442, 4
        %s444 = scalar_lea.vmem %s0, %s443
        %p445 = pneg %p49
        %p446 = pneg %p46
        %p447 = pneg %p70
        %p448 = pneg %p67
        %p449 = pneg %p91
        %p450 = pneg %p88
        %p451 = pneg %p112
        %p452 = pneg %p109
        %p453 = pneg %p133
        %p454 = pneg %p130
        %p455 = pneg %p154
        %p456 = pneg %p151
        %p457 = pneg %p175
        %p458 = pneg %p172
        %p459 = pneg %p196
        %p460 = pneg %p193
        %p461 = pneg %p217
        %p462 = pneg %p214
        %p463 = pneg %p238
        %p464 = pneg %p235
        %p465 = pneg %p259
        %p466 = pneg %p256
        %p467 = pneg %p280
        %p468 = pneg %p277
        %p469 = pneg %p301
        %p470 = pneg %p298
        %p471 = pneg %p322
        %p472 = pneg %p319
        %p473 = pneg %p348
        %p474 = pneg %p345
        %p475 = scmp.lt.s32.totalorder %s28, 1
        %s476 = scalar_select %p475, %s28, 1
        %s477 = smul.addr %s476, 8
        %s478 = scalar_lea.vmem %s14, %s477
        %p479 = pneg %p369
        %p480 = pneg %p366
        %p481 = scmp.lt.s32.totalorder %s28, 1
        %s482 = scalar_select %p481, %s28, 1
        %s483 = smul.addr %s482, 4
        %s484 = scalar_lea.vmem %s0, %s483
        %p485 = scmp.lt.s32.totalorder %s28, 1
        %s486 = scalar_select %p485, %s28, 1
        %s487 = smul.addr %s486, 8
        %s488 = scalar_lea.vmem %s14, %s487
        %p490 = scmp.eq.s32.totalorder %s28, 0
        // Predicated region
        $region77: #{gru_model_forward.1} parent=75 // pred_check
          %p491 = pneg %p490
        $region78: #{gru_model_forward.1} parent=75 // pred_check_branch
          %493 = sbr.rel (%p491) target = $region80
        $region79: #{gru_model_forward.1} parent=75 // pred_region
          %v494 = vld [vmem:[%s1] sm:$0x3]
          %vm495 = vcmask 254976
          %496 = vst.msk [vmem:[#allocation2] sm:$0x3] %vm495, %v494
        $region80: #{gru_model_forward.1} parent=75 // pred_fallthru
          _
        %v497 = vld [vmem:[%s484] sm:$0xf]
        %v498 = vld [vmem:[%s2] sm:$0xf]
        %v499 = vld [vmem:[%s2 + $0x4] sm:$0xf]
        %v500 = vld [vmem:[%s2 + $0x8] sm:$0xf]
        %v501 = vld [vmem:[%s2 + $0xc] sm:$0xf]
        %v502 = vld [vmem:[%s8] sm:$0x1]
        %v504 = vlaneseq
        %v505 = vshrl.u32 %v504, 7
        %v506 = vsub.s32 0, %v505
        %v507 = vrot.slane %v502, %v506
        %v513 = vunpack.c.l.b16 %v498
        %v514 = vunpack.c.l.b16 %v499
        %v515 = vunpack.c.l.b16 %v500
        %v516 = vunpack.c.l.b16 %v501
        %v517 = vpack.c.b16 %v514, %v513
        %v518 = vpack.c.b16 %v516, %v515
        %vm521 = vcmask 261120
        %v523 = vsel %vm521, %v497, 0
        %525 = vmatprep.subr.bf16.mxu0 0
        %526 = vmatpush1.bf16.msra.mxu0 0
        %527 = vmatprep.subr.bf16.mxu0 0
        %528 = vmatpush1.bf16.msra.mxu0 0
        %529 = vmatprep.subr.bf16.mxu0 0
        %530 = vmatpush1.bf16.msra.mxu0 0
        %531 = vmatprep.subr.bf16.mxu0 0
        %532 = vmatpush1.bf16.msra.mxu0 0
        %533 = vmatprep.subr.bf16.mxu0 0
        %534 = vmatpush1.bf16.msra.mxu0 0
        %535 = vmatprep.subr.bf16.mxu0 0
        %536 = vmatpush1.bf16.msra.mxu0 0
        %537 = vmatprep.subr.bf16.mxu0 0
        %538 = vmatpush1.bf16.msra.mxu0 %v518
        %539 = vmatprep.subr.bf16.mxu0 0
        %540 = vmatpush1.bf16.msra.mxu0 %v517
        %541 = vmatprep.subr.bf16.mxu0 0
        %542 = vmatpush2.bf16.msra.mxu0 0
        %543 = vmatprep.subr.bf16.mxu0 0
        %544 = vmatpush2.bf16.msra.mxu0 0
        %545 = vmatprep.subr.bf16.mxu0 0
        %546 = vmatpush2.bf16.msra.mxu0 0
        %547 = vmatprep.subr.bf16.mxu0 0
        %548 = vmatpush2.bf16.msra.mxu0 0
        %549 = vmatprep.subr.bf16.mxu0 0
        %550 = vmatpush2.bf16.msra.mxu0 0
        %551 = vmatprep.subr.bf16.mxu0 0
        %552 = vmatpush2.bf16.msra.mxu0 0
        %553 = vmatprep.subr.bf16.mxu0 0
        %554 = vmatpush2.bf16.msra.mxu0 0
        %555 = vmatprep.subr.bf16.mxu0 0
        %556 = vmatpush2.bf16.msra.mxu0 0
        %557 = vmatprep.mubr.bf16.mxu0 0
        %558 = vmatmul.mubr.bf16.gmra.mxu0 %v523
        %v559 = vpop.f32.mrf.mxu0
        %v560 = vadd.f32 %v507, %v559
        %v561 = vpop.f32.mrf.mxu0
        %v562 = vpop.f32.mrf.mxu0
        %v563 = vpop.f32.mrf.mxu0
        %564 = vdwg.mxu0
        %v565 = vld [vmem:[%s3] sm:$0xf]
        %v566 = vld [vmem:[%s3 + $0x4] sm:$0xf]
        %v567 = vld [vmem:[%s3 + $0x8] sm:$0xf]
        %v568 = vld [vmem:[%s3 + $0xc] sm:$0xf]
        %v569 = vld [vmem:[%s9] sm:$0x1]
        %v571 = vlaneseq
        %v572 = vshrl.u32 %v571, 7
        %v573 = vsub.s32 0, %v572
        %v574 = vrot.slane %v569, %v573
        %v580 = vunpack.c.l.b16 %v565
        %v581 = vunpack.c.l.b16 %v566
        %v582 = vunpack.c.l.b16 %v567
        %v583 = vunpack.c.l.b16 %v568
        %v584 = vpack.c.b16 %v581, %v580
        %v585 = vpack.c.b16 %v583, %v582
        %588 = vmatprep.subr.bf16.mxu0 0
        %589 = vmatpush1.bf16.msra.mxu0 0
        %590 = vmatprep.subr.bf16.mxu0 0
        %591 = vmatpush1.bf16.msra.mxu0 0
        %592 = vmatprep.subr.bf16.mxu0 0
        %593 = vmatpush1.bf16.msra.mxu0 0
        %594 = vmatprep.subr.bf16.mxu0 0
        %595 = vmatpush1.bf16.msra.mxu0 0
        %596 = vmatprep.subr.bf16.mxu0 0
        %597 = vmatpush1.bf16.msra.mxu0 0
        %598 = vmatprep.subr.bf16.mxu0 0
        %599 = vmatpush1.bf16.msra.mxu0 0
        %600 = vmatprep.subr.bf16.mxu0 0
        %601 = vmatpush1.bf16.msra.mxu0 %v585
        %602 = vmatprep.subr.bf16.mxu0 0
        %603 = vmatpush1.bf16.msra.mxu0 %v584
        %604 = vmatprep.subr.bf16.mxu0 0
        %605 = vmatpush2.bf16.msra.mxu0 0
        %606 = vmatprep.subr.bf16.mxu0 0
        %607 = vmatpush2.bf16.msra.mxu0 0
        %608 = vmatprep.subr.bf16.mxu0 0
        %609 = vmatpush2.bf16.msra.mxu0 0
        %610 = vmatprep.subr.bf16.mxu0 0
        %611 = vmatpush2.bf16.msra.mxu0 0
        %612 = vmatprep.subr.bf16.mxu0 0
        %613 = vmatpush2.bf16.msra.mxu0 0
        %614 = vmatprep.subr.bf16.mxu0 0
        %615 = vmatpush2.bf16.msra.mxu0 0
        %616 = vmatprep.subr.bf16.mxu0 0
        %617 = vmatpush2.bf16.msra.mxu0 0
        %618 = vmatprep.subr.bf16.mxu0 0
        %619 = vmatpush2.bf16.msra.mxu0 0
        %620 = vmatprep.mubr.bf16.mxu0 0
        %621 = vmatmul.mubr.bf16.gmra.mxu0 %v523
        %v622 = vpop.f32.mrf.mxu0
        %v623 = vadd.f32 %v574, %v622
        %v624 = vpop.f32.mrf.mxu0
        %v625 = vpop.f32.mrf.mxu0
        %v626 = vpop.f32.mrf.mxu0
        %627 = vdwg.mxu0
        %v628 = vld [vmem:[%s4] sm:$0xf]
        %v629 = vld [vmem:[%s4 + $0x4] sm:$0xf]
        %v630 = vld [vmem:[%s4 + $0x8] sm:$0xf]
        %v631 = vld [vmem:[%s4 + $0xc] sm:$0xf]
        %v632 = vld [vmem:[%s10] sm:$0x1]
        %v634 = vlaneseq
        %v635 = vshrl.u32 %v634, 7
        %v636 = vsub.s32 0, %v635
        %v637 = vrot.slane %v632, %v636
        %v643 = vunpack.c.l.b16 %v628
        %v644 = vunpack.c.l.b16 %v629
        %v645 = vunpack.c.l.b16 %v630
        %v646 = vunpack.c.l.b16 %v631
        %v647 = vpack.c.b16 %v644, %v643
        %v648 = vpack.c.b16 %v646, %v645
        %651 = vmatprep.subr.bf16.mxu0 0
        %652 = vmatpush1.bf16.msra.mxu0 0
        %653 = vmatprep.subr.bf16.mxu0 0
        %654 = vmatpush1.bf16.msra.mxu0 0
        %655 = vmatprep.subr.bf16.mxu0 0
        %656 = vmatpush1.bf16.msra.mxu0 0
        %657 = vmatprep.subr.bf16.mxu0 0
        %658 = vmatpush1.bf16.msra.mxu0 0
        %659 = vmatprep.subr.bf16.mxu0 0
        %660 = vmatpush1.bf16.msra.mxu0 0
        %661 = vmatprep.subr.bf16.mxu0 0
        %662 = vmatpush1.bf16.msra.mxu0 0
        %663 = vmatprep.subr.bf16.mxu0 0
        %664 = vmatpush1.bf16.msra.mxu0 %v648
        %665 = vmatprep.subr.bf16.mxu0 0
        %666 = vmatpush1.bf16.msra.mxu0 %v647
        %667 = vmatprep.subr.bf16.mxu0 0
        %668 = vmatpush2.bf16.msra.mxu0 0
        %669 = vmatprep.subr.bf16.mxu0 0
        %670 = vmatpush2.bf16.msra.mxu0 0
        %671 = vmatprep.subr.bf16.mxu0 0
        %672 = vmatpush2.bf16.msra.mxu0 0
        %673 = vmatprep.subr.bf16.mxu0 0
        %674 = vmatpush2.bf16.msra.mxu0 0
        %675 = vmatprep.subr.bf16.mxu0 0
        %676 = vmatpush2.bf16.msra.mxu0 0
        %677 = vmatprep.subr.bf16.mxu0 0
        %678 = vmatpush2.bf16.msra.mxu0 0
        %679 = vmatprep.subr.bf16.mxu0 0
        %680 = vmatpush2.bf16.msra.mxu0 0
        %681 = vmatprep.subr.bf16.mxu0 0
        %682 = vmatpush2.bf16.msra.mxu0 0
        %683 = vmatprep.mubr.bf16.mxu0 0
        %684 = vmatmul.mubr.bf16.gmra.mxu0 %v523
        %v685 = vpop.f32.mrf.mxu0
        %v686 = vadd.f32 %v637, %v685
        %v687 = vpop.f32.mrf.mxu0
        %v688 = vpop.f32.mrf.mxu0
        %v689 = vpop.f32.mrf.mxu0
        %690 = vdwg.mxu0
        %v691 = vld [vmem:[%s5] sm:$0xf]
        %v692 = vld [vmem:[%s5 + $0x4] sm:$0xf]
        %v693 = vld [vmem:[%s5 + $0x8] sm:$0xf]
        %v694 = vld [vmem:[%s5 + $0xc] sm:$0xf]
        %v695 = vld [vmem:[%s6] sm:$0xf]
        %v696 = vld [vmem:[%s6 + $0x4] sm:$0xf]
        %v697 = vld [vmem:[%s6 + $0x8] sm:$0xf]
        %v698 = vld [vmem:[%s6 + $0xc] sm:$0xf]
        %v699 = vld [vmem:[%s7] sm:$0xf]
        %v700 = vld [vmem:[%s7 + $0x4] sm:$0xf]
        %v701 = vld [vmem:[%s7 + $0x8] sm:$0xf]
        %v702 = vld [vmem:[%s7 + $0xc] sm:$0xf]
        %v703 = vld [vmem:[%s11] sm:$0x1]
        %v704 = vld [vmem:[#allocation2] sm:$0x3]
        %v705 = vpack.c.bf16 %v704, %v704
        %v710 = vunpack.c.l.b16 %v691
        %v711 = vunpack.c.l.b16 %v692
        %v712 = vunpack.c.l.b16 %v693
        %v713 = vunpack.c.l.b16 %v694
        %v714 = vpack.c.b16 %v711, %v710
        %v715 = vpack.c.b16 %v713, %v712
        %v719 = vsel %vm521, %v705, 0
        %721 = vmatprep.subr.bf16.mxu0 0
        %722 = vmatpush1.bf16.msra.mxu0 0
        %723 = vmatprep.subr.bf16.mxu0 0
        %724 = vmatpush1.bf16.msra.mxu0 0
        %725 = vmatprep.subr.bf16.mxu0 0
        %726 = vmatpush1.bf16.msra.mxu0 0
        %727 = vmatprep.subr.bf16.mxu0 0
        %728 = vmatpush1.bf16.msra.mxu0 0
        %729 = vmatprep.subr.bf16.mxu0 0
        %730 = vmatpush1.bf16.msra.mxu0 0
        %731 = vmatprep.subr.bf16.mxu0 0
        %732 = vmatpush1.bf16.msra.mxu0 0
        %733 = vmatprep.subr.bf16.mxu0 0
        %734 = vmatpush1.bf16.msra.mxu0 %v715
        %735 = vmatprep.subr.bf16.mxu0 0
        %736 = vmatpush1.bf16.msra.mxu0 %v714
        %737 = vmatprep.subr.bf16.mxu0 0
        %738 = vmatpush2.bf16.msra.mxu0 0
        %739 = vmatprep.subr.bf16.mxu0 0
        %740 = vmatpush2.bf16.msra.mxu0 0
        %741 = vmatprep.subr.bf16.mxu0 0
        %742 = vmatpush2.bf16.msra.mxu0 0
        %743 = vmatprep.subr.bf16.mxu0 0
        %744 = vmatpush2.bf16.msra.mxu0 0
        %745 = vmatprep.subr.bf16.mxu0 0
        %746 = vmatpush2.bf16.msra.mxu0 0
        %747 = vmatprep.subr.bf16.mxu0 0
        %748 = vmatpush2.bf16.msra.mxu0 0
        %749 = vmatprep.subr.bf16.mxu0 0
        %750 = vmatpush2.bf16.msra.mxu0 0
        %751 = vmatprep.subr.bf16.mxu0 0
        %752 = vmatpush2.bf16.msra.mxu0 0
        %753 = vmatprep.mubr.bf16.mxu0 0
        %754 = vmatmul.mubr.bf16.gmra.mxu0 %v719
        %v755 = vpop.f32.mrf.mxu0
        %v756 = vadd.f32 0.0, %v755
        %v757 = vpop.f32.mrf.mxu0
        %v758 = vpop.f32.mrf.mxu0
        %v759 = vpop.f32.mrf.mxu0
        %760 = vdwg.mxu0
        %v765 = vunpack.c.l.b16 %v695
        %v766 = vunpack.c.l.b16 %v696
        %v767 = vunpack.c.l.b16 %v697
        %v768 = vunpack.c.l.b16 %v698
        %v769 = vpack.c.b16 %v766, %v765
        %v770 = vpack.c.b16 %v768, %v767
        %773 = vmatprep.subr.bf16.mxu0 0
        %774 = vmatpush1.bf16.msra.mxu0 0
        %775 = vmatprep.subr.bf16.mxu0 0
        %776 = vmatpush1.bf16.msra.mxu0 0
        %777 = vmatprep.subr.bf16.mxu0 0
        %778 = vmatpush1.bf16.msra.mxu0 0
        %779 = vmatprep.subr.bf16.mxu0 0
        %780 = vmatpush1.bf16.msra.mxu0 0
        %781 = vmatprep.subr.bf16.mxu0 0
        %782 = vmatpush1.bf16.msra.mxu0 0
        %783 = vmatprep.subr.bf16.mxu0 0
        %784 = vmatpush1.bf16.msra.mxu0 0
        %785 = vmatprep.subr.bf16.mxu0 0
        %786 = vmatpush1.bf16.msra.mxu0 %v770
        %787 = vmatprep.subr.bf16.mxu0 0
        %788 = vmatpush1.bf16.msra.mxu0 %v769
        %789 = vmatprep.subr.bf16.mxu0 0
        %790 = vmatpush2.bf16.msra.mxu0 0
        %791 = vmatprep.subr.bf16.mxu0 0
        %792 = vmatpush2.bf16.msra.mxu0 0
        %793 = vmatprep.subr.bf16.mxu0 0
        %794 = vmatpush2.bf16.msra.mxu0 0
        %795 = vmatprep.subr.bf16.mxu0 0
        %796 = vmatpush2.bf16.msra.mxu0 0
        %797 = vmatprep.subr.bf16.mxu0 0
        %798 = vmatpush2.bf16.msra.mxu0 0
        %799 = vmatprep.subr.bf16.mxu0 0
        %800 = vmatpush2.bf16.msra.mxu0 0
        %801 = vmatprep.subr.bf16.mxu0 0
        %802 = vmatpush2.bf16.msra.mxu0 0
        %803 = vmatprep.subr.bf16.mxu0 0
        %804 = vmatpush2.bf16.msra.mxu0 0
        %805 = vmatprep.mubr.bf16.mxu0 0
        %806 = vmatmul.mubr.bf16.gmra.mxu0 %v719
        %v807 = vpop.f32.mrf.mxu0
        %v808 = vadd.f32 0.0, %v807
        %v809 = vpop.f32.mrf.mxu0
        %v810 = vpop.f32.mrf.mxu0
        %v811 = vpop.f32.mrf.mxu0
        %812 = vdwg.mxu0
        %v814 = vlaneseq
        %v815 = vshrl.u32 %v814, 7
        %v816 = vsub.s32 0, %v815
        %v817 = vrot.slane %v703, %v816
        %v823 = vunpack.c.l.b16 %v699
        %v824 = vunpack.c.l.b16 %v700
        %v825 = vunpack.c.l.b16 %v701
        %v826 = vunpack.c.l.b16 %v702
        %v827 = vpack.c.b16 %v824, %v823
        %v828 = vpack.c.b16 %v826, %v825
        %831 = vmatprep.subr.bf16.mxu0 0
        %832 = vmatpush1.bf16.msra.mxu0 0
        %833 = vmatprep.subr.bf16.mxu0 0
        %834 = vmatpush1.bf16.msra.mxu0 0
        %835 = vmatprep.subr.bf16.mxu0 0
        %836 = vmatpush1.bf16.msra.mxu0 0
        %837 = vmatprep.subr.bf16.mxu0 0
        %838 = vmatpush1.bf16.msra.mxu0 0
        %839 = vmatprep.subr.bf16.mxu0 0
        %840 = vmatpush1.bf16.msra.mxu0 0
        %841 = vmatprep.subr.bf16.mxu0 0
        %842 = vmatpush1.bf16.msra.mxu0 0
        %843 = vmatprep.subr.bf16.mxu0 0
        %844 = vmatpush1.bf16.msra.mxu0 %v828
        %845 = vmatprep.subr.bf16.mxu0 0
        %846 = vmatpush1.bf16.msra.mxu0 %v827
        %847 = vmatprep.subr.bf16.mxu0 0
        %848 = vmatpush2.bf16.msra.mxu0 0
        %849 = vmatprep.subr.bf16.mxu0 0
        %850 = vmatpush2.bf16.msra.mxu0 0
        %851 = vmatprep.subr.bf16.mxu0 0
        %852 = vmatpush2.bf16.msra.mxu0 0
        %853 = vmatprep.subr.bf16.mxu0 0
        %854 = vmatpush2.bf16.msra.mxu0 0
        %855 = vmatprep.subr.bf16.mxu0 0
        %856 = vmatpush2.bf16.msra.mxu0 0
        %857 = vmatprep.subr.bf16.mxu0 0
        %858 = vmatpush2.bf16.msra.mxu0 0
        %859 = vmatprep.subr.bf16.mxu0 0
        %860 = vmatpush2.bf16.msra.mxu0 0
        %861 = vmatprep.subr.bf16.mxu0 0
        %862 = vmatpush2.bf16.msra.mxu0 0
        %863 = vmatprep.mubr.bf16.mxu0 0
        %864 = vmatmul.mubr.bf16.gmra.mxu0 %v719
        %v865 = vpop.f32.mrf.mxu0
        %v866 = vadd.f32 %v817, %v865
        %v867 = vpop.f32.mrf.mxu0
        %v868 = vpop.f32.mrf.mxu0
        %v869 = vpop.f32.mrf.mxu0
        %870 = vdwg.mxu0
        %v871 = vadd.f32 %v560, %v756
        %v872 = vxor.u32 %v871, 2147483648
        %v873 = vmul.f32 %v872, 1.442695
        %v874 = vpow.pop %v873
        %v875 = vadd.f32 %v874, 1.0
        %v876 = vrcp.pop %v875
        %v877 = vmul.f32 1.0, %v876
        %v878 = vadd.f32 %v623, %v808
        %v879 = vxor.u32 %v878, 2147483648
        %v880 = vmul.f32 %v879, 1.442695
        %v881 = vpow.pop %v880
        %v882 = vadd.f32 %v881, 1.0
        %v883 = vrcp.pop %v882
        %v884 = vmul.f32 1.0, %v883
        %v885 = vmul.f32 %v877, %v866
        %v886 = vadd.f32 %v686, %v885
        %v887 = vtanh.pop %v886
        %v888 = vsub.f32 1.0, %v884
        %v889 = vmul.f32 %v888, %v887
        %v890 = vmul.f32 %v884, %v704
        %v891 = vadd.f32 %v889, %v890
        %v892 = vpack.c.bf16 %v891, %v891
        %v894 = vsel %vm521, %v892, 0
        %896 = vmatprep.subr.bf16.mxu0 0
        %897 = vmatpush1.bf16.msra.mxu0 0
        %898 = vmatprep.subr.bf16.mxu0 0
        %899 = vmatpush1.bf16.msra.mxu0 0
        %900 = vmatprep.subr.bf16.mxu0 0
        %901 = vmatpush1.bf16.msra.mxu0 0
        %902 = vmatprep.subr.bf16.mxu0 0
        %903 = vmatpush1.bf16.msra.mxu0 0
        %904 = vmatprep.subr.bf16.mxu0 0
        %905 = vmatpush1.bf16.msra.mxu0 0
        %906 = vmatprep.subr.bf16.mxu0 0
        %907 = vmatpush1.bf16.msra.mxu0 0
        %908 = vmatprep.subr.bf16.mxu0 0
        %909 = vmatpush1.bf16.msra.mxu0 %v715
        %910 = vmatprep.subr.bf16.mxu0 0
        %911 = vmatpush1.bf16.msra.mxu0 %v714
        %912 = vmatprep.subr.bf16.mxu0 0
        %913 = vmatpush2.bf16.msra.mxu0 0
        %914 = vmatprep.subr.bf16.mxu0 0
        %915 = vmatpush2.bf16.msra.mxu0 0
        %916 = vmatprep.subr.bf16.mxu0 0
        %917 = vmatpush2.bf16.msra.mxu0 0
        %918 = vmatprep.subr.bf16.mxu0 0
        %919 = vmatpush2.bf16.msra.mxu0 0
        %920 = vmatprep.subr.bf16.mxu0 0
        %921 = vmatpush2.bf16.msra.mxu0 0
        %922 = vmatprep.subr.bf16.mxu0 0
        %923 = vmatpush2.bf16.msra.mxu0 0
        %924 = vmatprep.subr.bf16.mxu0 0
        %925 = vmatpush2.bf16.msra.mxu0 0
        %926 = vmatprep.subr.bf16.mxu0 0
        %927 = vmatpush2.bf16.msra.mxu0 0
        %928 = vmatprep.mubr.bf16.mxu0 0
        %929 = vmatmul.mubr.bf16.gmra.mxu0 %v894
        %v930 = vpop.f32.mrf.mxu0
        %v931 = vadd.f32 0.0, %v930
        %v932 = vpop.f32.mrf.mxu0
        %v933 = vpop.f32.mrf.mxu0
        %v934 = vpop.f32.mrf.mxu0
        %935 = vdwg.mxu0
        %936 = vmatprep.subr.bf16.mxu0 0
        %937 = vmatpush1.bf16.msra.mxu0 0
        %938 = vmatprep.subr.bf16.mxu0 0
        %939 = vmatpush1.bf16.msra.mxu0 0
        %940 = vmatprep.subr.bf16.mxu0 0
        %941 = vmatpush1.bf16.msra.mxu0 0
        %942 = vmatprep.subr.bf16.mxu0 0
        %943 = vmatpush1.bf16.msra.mxu0 0
        %944 = vmatprep.subr.bf16.mxu0 0
        %945 = vmatpush1.bf16.msra.mxu0 0
        %946 = vmatprep.subr.bf16.mxu0 0
        %947 = vmatpush1.bf16.msra.mxu0 0
        %948 = vmatprep.subr.bf16.mxu0 0
        %949 = vmatpush1.bf16.msra.mxu0 %v770
        %950 = vmatprep.subr.bf16.mxu0 0
        %951 = vmatpush1.bf16.msra.mxu0 %v769
        %952 = vmatprep.subr.bf16.mxu0 0
        %953 = vmatpush2.bf16.msra.mxu0 0
        %954 = vmatprep.subr.bf16.mxu0 0
        %955 = vmatpush2.bf16.msra.mxu0 0
        %956 = vmatprep.subr.bf16.mxu0 0
        %957 = vmatpush2.bf16.msra.mxu0 0
        %958 = vmatprep.subr.bf16.mxu0 0
        %959 = vmatpush2.bf16.msra.mxu0 0
        %960 = vmatprep.subr.bf16.mxu0 0
        %961 = vmatpush2.bf16.msra.mxu0 0
        %962 = vmatprep.subr.bf16.mxu0 0
        %963 = vmatpush2.bf16.msra.mxu0 0
        %964 = vmatprep.subr.bf16.mxu0 0
        %965 = vmatpush2.bf16.msra.mxu0 0
        %966 = vmatprep.subr.bf16.mxu0 0
        %967 = vmatpush2.bf16.msra.mxu0 0
        %968 = vmatprep.mubr.bf16.mxu0 0
        %969 = vmatmul.mubr.bf16.gmra.mxu0 %v894
        %v970 = vpop.f32.mrf.mxu0
        %v971 = vadd.f32 0.0, %v970
        %v972 = vpop.f32.mrf.mxu0
        %v973 = vpop.f32.mrf.mxu0
        %v974 = vpop.f32.mrf.mxu0
        %975 = vdwg.mxu0
        %976 = vmatprep.subr.bf16.mxu0 0
        %977 = vmatpush1.bf16.msra.mxu0 0
        %978 = vmatprep.subr.bf16.mxu0 0
        %979 = vmatpush1.bf16.msra.mxu0 0
        %980 = vmatprep.subr.bf16.mxu0 0
        %981 = vmatpush1.bf16.msra.mxu0 0
        %982 = vmatprep.subr.bf16.mxu0 0
        %983 = vmatpush1.bf16.msra.mxu0 0
        %984 = vmatprep.subr.bf16.mxu0 0
        %985 = vmatpush1.bf16.msra.mxu0 0
        %986 = vmatprep.subr.bf16.mxu0 0
        %987 = vmatpush1.bf16.msra.mxu0 0
        %988 = vmatprep.subr.bf16.mxu0 0
        %989 = vmatpush1.bf16.msra.mxu0 %v828
        %990 = vmatprep.subr.bf16.mxu0 0
        %991 = vmatpush1.bf16.msra.mxu0 %v827
        %992 = vmatprep.subr.bf16.mxu0 0
        %993 = vmatpush2.bf16.msra.mxu0 0
        %994 = vmatprep.subr.bf16.mxu0 0
        %995 = vmatpush2.bf16.msra.mxu0 0
        %996 = vmatprep.subr.bf16.mxu0 0
        %997 = vmatpush2.bf16.msra.mxu0 0
        %998 = vmatprep.subr.bf16.mxu0 0
        %999 = vmatpush2.bf16.msra.mxu0 0
        %1000 = vmatprep.subr.bf16.mxu0 0
        %1001 = vmatpush2.bf16.msra.mxu0 0
        %1002 = vmatprep.subr.bf16.mxu0 0
        %1003 = vmatpush2.bf16.msra.mxu0 0
        %1004 = vmatprep.subr.bf16.mxu0 0
        %1005 = vmatpush2.bf16.msra.mxu0 0
        %1006 = vmatprep.subr.bf16.mxu0 0
        %1007 = vmatpush2.bf16.msra.mxu0 0
        %1008 = vmatprep.mubr.bf16.mxu0 0
        %1009 = vmatmul.mubr.bf16.gmra.mxu0 %v894
        %v1010 = vpop.f32.mrf.mxu0
        %v1011 = vadd.f32 %v817, %v1010
        %v1012 = vpop.f32.mrf.mxu0
        %v1013 = vpop.f32.mrf.mxu0
        %v1014 = vpop.f32.mrf.mxu0
        %1015 = vdwg.mxu0
        %v1017 = vrot.slane %v931, 6
        %v1019 = vadd.f32 %v560, %v1017
        %v1020 = vxor.u32 %v1019, 2147483648
        %v1021 = vmul.f32 %v1020, 1.442695
        %v1022 = vpow.pop %v1021
        %v1023 = vadd.f32 %v1022, 1.0
        %v1024 = vrcp.pop %v1023
        %v1025 = vmul.f32 1.0, %v1024
        %v1027 = vrot.slane %v971, 6
        %v1029 = vadd.f32 %v623, %v1027
        %v1030 = vxor.u32 %v1029, 2147483648
        %v1031 = vmul.f32 %v1030, 1.442695
        %v1032 = vpow.pop %v1031
        %v1033 = vadd.f32 %v1032, 1.0
        %v1034 = vrcp.pop %v1033
        %v1035 = vmul.f32 1.0, %v1034
        %v1037 = vrot.slane %v1011, 6
        %v1039 = vmul.f32 %v1025, %v1037
        %v1040 = vadd.f32 %v686, %v1039
        %v1041 = vtanh.pop %v1040
        %v1042 = vsub.f32 1.0, %v1035
        %v1043 = vmul.f32 %v1042, %v1041
        %v1045 = vrot.slane %v891, 6
        %v1047 = vmul.f32 %v1035, %v1045
        %v1048 = vadd.f32 %v1043, %v1047
        %v1049 = vpack.c.bf16 %v1048, %v1048
        %v1051 = vrot.slane %v1049, 1
        %v1053 = vsel %vm521, %v1051, 0
        %1055 = vmatprep.subr.bf16.mxu0 0
        %1056 = vmatpush1.bf16.msra.mxu0 0
        %1057 = vmatprep.subr.bf16.mxu0 0
        %1058 = vmatpush1.bf16.msra.mxu0 0
        %1059 = vmatprep.subr.bf16.mxu0 0
        %1060 = vmatpush1.bf16.msra.mxu0 0
        %1061 = vmatprep.subr.bf16.mxu0 0
        %1062 = vmatpush1.bf16.msra.mxu0 0
        %1063 = vmatprep.subr.bf16.mxu0 0
        %1064 = vmatpush1.bf16.msra.mxu0 0
        %1065 = vmatprep.subr.bf16.mxu0 0
        %1066 = vmatpush1.bf16.msra.mxu0 0
        %1067 = vmatprep.subr.bf16.mxu0 0
        %1068 = vmatpush1.bf16.msra.mxu0 %v715
        %1069 = vmatprep.subr.bf16.mxu0 0
        %1070 = vmatpush1.bf16.msra.mxu0 %v714
        %1071 = vmatprep.subr.bf16.mxu0 0
        %1072 = vmatpush2.bf16.msra.mxu0 0
        %1073 = vmatprep.subr.bf16.mxu0 0
        %1074 = vmatpush2.bf16.msra.mxu0 0
        %1075 = vmatprep.subr.bf16.mxu0 0
        %1076 = vmatpush2.bf16.msra.mxu0 0
        %1077 = vmatprep.subr.bf16.mxu0 0
        %1078 = vmatpush2.bf16.msra.mxu0 0
        %1079 = vmatprep.subr.bf16.mxu0 0
        %1080 = vmatpush2.bf16.msra.mxu0 0
        %1081 = vmatprep.subr.bf16.mxu0 0
        %1082 = vmatpush2.bf16.msra.mxu0 0
        %1083 = vmatprep.subr.bf16.mxu0 0
        %1084 = vmatpush2.bf16.msra.mxu0 0
        %1085 = vmatprep.subr.bf16.mxu0 0
        %1086 = vmatpush2.bf16.msra.mxu0 0
        %1087 = vmatprep.mubr.bf16.mxu0 0
        %1088 = vmatmul.mubr.bf16.gmra.mxu0 %v1053
        %v1089 = vpop.f32.mrf.mxu0
        %v1090 = vadd.f32 0.0, %v1089
        %v1091 = vpop.f32.mrf.mxu0
        %v1092 = vpop.f32.mrf.mxu0
        %v1093 = vpop.f32.mrf.mxu0
        %1094 = vdwg.mxu0
        %1095 = vmatprep.subr.bf16.mxu0 0
        %1096 = vmatpush1.bf16.msra.mxu0 0
        %1097 = vmatprep.subr.bf16.mxu0 0
        %1098 = vmatpush1.bf16.msra.mxu0 0
        %1099 = vmatprep.subr.bf16.mxu0 0
        %1100 = vmatpush1.bf16.msra.mxu0 0
        %1101 = vmatprep.subr.bf16.mxu0 0
        %1102 = vmatpush1.bf16.msra.mxu0 0
        %1103 = vmatprep.subr.bf16.mxu0 0
        %1104 = vmatpush1.bf16.msra.mxu0 0
        %1105 = vmatprep.subr.bf16.mxu0 0
        %1106 = vmatpush1.bf16.msra.mxu0 0
        %1107 = vmatprep.subr.bf16.mxu0 0
        %1108 = vmatpush1.bf16.msra.mxu0 %v770
        %1109 = vmatprep.subr.bf16.mxu0 0
        %1110 = vmatpush1.bf16.msra.mxu0 %v769
        %1111 = vmatprep.subr.bf16.mxu0 0
        %1112 = vmatpush2.bf16.msra.mxu0 0
        %1113 = vmatprep.subr.bf16.mxu0 0
        %1114 = vmatpush2.bf16.msra.mxu0 0
        %1115 = vmatprep.subr.bf16.mxu0 0
        %1116 = vmatpush2.bf16.msra.mxu0 0
        %1117 = vmatprep.subr.bf16.mxu0 0
        %1118 = vmatpush2.bf16.msra.mxu0 0
        %1119 = vmatprep.subr.bf16.mxu0 0
        %1120 = vmatpush2.bf16.msra.mxu0 0
        %1121 = vmatprep.subr.bf16.mxu0 0
        %1122 = vmatpush2.bf16.msra.mxu0 0
        %1123 = vmatprep.subr.bf16.mxu0 0
        %1124 = vmatpush2.bf16.msra.mxu0 0
        %1125 = vmatprep.subr.bf16.mxu0 0
        %1126 = vmatpush2.bf16.msra.mxu0 0
        %1127 = vmatprep.mubr.bf16.mxu0 0
        %1128 = vmatmul.mubr.bf16.gmra.mxu0 %v1053
        %v1129 = vpop.f32.mrf.mxu0
        %v1130 = vadd.f32 0.0, %v1129
        %v1131 = vpop.f32.mrf.mxu0
        %v1132 = vpop.f32.mrf.mxu0
        %v1133 = vpop.f32.mrf.mxu0
        %1134 = vdwg.mxu0
        %1135 = vmatprep.subr.bf16.mxu0 0
        %1136 = vmatpush1.bf16.msra.mxu0 0
        %1137 = vmatprep.subr.bf16.mxu0 0
        %1138 = vmatpush1.bf16.msra.mxu0 0
        %1139 = vmatprep.subr.bf16.mxu0 0
        %1140 = vmatpush1.bf16.msra.mxu0 0
        %1141 = vmatprep.subr.bf16.mxu0 0
        %1142 = vmatpush1.bf16.msra.mxu0 0
        %1143 = vmatprep.subr.bf16.mxu0 0
        %1144 = vmatpush1.bf16.msra.mxu0 0
        %1145 = vmatprep.subr.bf16.mxu0 0
        %1146 = vmatpush1.bf16.msra.mxu0 0
        %1147 = vmatprep.subr.bf16.mxu0 0
        %1148 = vmatpush1.bf16.msra.mxu0 %v828
        %1149 = vmatprep.subr.bf16.mxu0 0
        %1150 = vmatpush1.bf16.msra.mxu0 %v827
        %1151 = vmatprep.subr.bf16.mxu0 0
        %1152 = vmatpush2.bf16.msra.mxu0 0
        %1153 = vmatprep.subr.bf16.mxu0 0
        %1154 = vmatpush2.bf16.msra.mxu0 0
        %1155 = vmatprep.subr.bf16.mxu0 0
        %1156 = vmatpush2.bf16.msra.mxu0 0
        %1157 = vmatprep.subr.bf16.mxu0 0
        %1158 = vmatpush2.bf16.msra.mxu0 0
        %1159 = vmatprep.subr.bf16.mxu0 0
        %1160 = vmatpush2.bf16.msra.mxu0 0
        %1161 = vmatprep.subr.bf16.mxu0 0
        %1162 = vmatpush2.bf16.msra.mxu0 0
        %1163 = vmatprep.subr.bf16.mxu0 0
        %1164 = vmatpush2.bf16.msra.mxu0 0
        %1165 = vmatprep.subr.bf16.mxu0 0
        %1166 = vmatpush2.bf16.msra.mxu0 0
        %1167 = vmatprep.mubr.bf16.mxu0 0
        %1168 = vmatmul.mubr.bf16.gmra.mxu0 %v1053
        %v1169 = vpop.f32.mrf.mxu0
        %v1170 = vadd.f32 %v817, %v1169
        %v1171 = vpop.f32.mrf.mxu0
        %v1172 = vpop.f32.mrf.mxu0
        %v1173 = vpop.f32.mrf.mxu0
        %1174 = vdwg.mxu0
        %v1176 = vrot.slane %v1090, 4
        %v1178 = vadd.f32 %v560, %v1176
        %v1179 = vxor.u32 %v1178, 2147483648
        %v1180 = vmul.f32 %v1179, 1.442695
        %v1181 = vpow.pop %v1180
        %v1182 = vadd.f32 %v1181, 1.0
        %v1183 = vrcp.pop %v1182
        %v1184 = vmul.f32 1.0, %v1183
        %v1186 = vrot.slane %v1130, 4
        %v1188 = vadd.f32 %v623, %v1186
        %v1189 = vxor.u32 %v1188, 2147483648
        %v1190 = vmul.f32 %v1189, 1.442695
        %v1191 = vpow.pop %v1190
        %v1192 = vadd.f32 %v1191, 1.0
        %v1193 = vrcp.pop %v1192
        %v1194 = vmul.f32 1.0, %v1193
        %v1196 = vrot.slane %v1170, 4
        %v1198 = vmul.f32 %v1184, %v1196
        %v1199 = vadd.f32 %v686, %v1198
        %v1200 = vtanh.pop %v1199
        %v1201 = vsub.f32 1.0, %v1194
        %v1202 = vmul.f32 %v1201, %v1200
        %v1204 = vrot.slane %v1048, 6
        %v1206 = vmul.f32 %v1194, %v1204
        %v1207 = vadd.f32 %v1202, %v1206
        %v1208 = vpack.c.bf16 %v1207, %v1207
        %v1210 = vrot.slane %v1208, 2
        %v1212 = vsel %vm521, %v1210, 0
        %1214 = vmatprep.subr.bf16.mxu0 0
        %1215 = vmatpush1.bf16.msra.mxu0 0
        %1216 = vmatprep.subr.bf16.mxu0 0
        %1217 = vmatpush1.bf16.msra.mxu0 0
        %1218 = vmatprep.subr.bf16.mxu0 0
        %1219 = vmatpush1.bf16.msra.mxu0 0
        %1220 = vmatprep.subr.bf16.mxu0 0
        %1221 = vmatpush1.bf16.msra.mxu0 0
        %1222 = vmatprep.subr.bf16.mxu0 0
        %1223 = vmatpush1.bf16.msra.mxu0 0
        %1224 = vmatprep.subr.bf16.mxu0 0
        %1225 = vmatpush1.bf16.msra.mxu0 0
        %1226 = vmatprep.subr.bf16.mxu0 0
        %1227 = vmatpush1.bf16.msra.mxu0 %v715
        %1228 = vmatprep.subr.bf16.mxu0 0
        %1229 = vmatpush1.bf16.msra.mxu0 %v714
        %1230 = vmatprep.subr.bf16.mxu0 0
        %1231 = vmatpush2.bf16.msra.mxu0 0
        %1232 = vmatprep.subr.bf16.mxu0 0
        %1233 = vmatpush2.bf16.msra.mxu0 0
        %1234 = vmatprep.subr.bf16.mxu0 0
        %1235 = vmatpush2.bf16.msra.mxu0 0
        %1236 = vmatprep.subr.bf16.mxu0 0
        %1237 = vmatpush2.bf16.msra.mxu0 0
        %1238 = vmatprep.subr.bf16.mxu0 0
        %1239 = vmatpush2.bf16.msra.mxu0 0
        %1240 = vmatprep.subr.bf16.mxu0 0
        %1241 = vmatpush2.bf16.msra.mxu0 0
        %1242 = vmatprep.subr.bf16.mxu0 0
        %1243 = vmatpush2.bf16.msra.mxu0 0
        %1244 = vmatprep.subr.bf16.mxu0 0
        %1245 = vmatpush2.bf16.msra.mxu0 0
        %1246 = vmatprep.mubr.bf16.mxu0 0
        %1247 = vmatmul.mubr.bf16.gmra.mxu0 %v1212
        %v1248 = vpop.f32.mrf.mxu0
        %v1249 = vadd.f32 0.0, %v1248
        %v1250 = vpop.f32.mrf.mxu0
        %v1251 = vpop.f32.mrf.mxu0
        %v1252 = vpop.f32.mrf.mxu0
        %1253 = vdwg.mxu0
        %1254 = vmatprep.subr.bf16.mxu0 0
        %1255 = vmatpush1.bf16.msra.mxu0 0
        %1256 = vmatprep.subr.bf16.mxu0 0
        %1257 = vmatpush1.bf16.msra.mxu0 0
        %1258 = vmatprep.subr.bf16.mxu0 0
        %1259 = vmatpush1.bf16.msra.mxu0 0
        %1260 = vmatprep.subr.bf16.mxu0 0
        %1261 = vmatpush1.bf16.msra.mxu0 0
        %1262 = vmatprep.subr.bf16.mxu0 0
        %1263 = vmatpush1.bf16.msra.mxu0 0
        %1264 = vmatprep.subr.bf16.mxu0 0
        %1265 = vmatpush1.bf16.msra.mxu0 0
        %1266 = vmatprep.subr.bf16.mxu0 0
        %1267 = vmatpush1.bf16.msra.mxu0 %v770
        %1268 = vmatprep.subr.bf16.mxu0 0
        %1269 = vmatpush1.bf16.msra.mxu0 %v769
        %1270 = vmatprep.subr.bf16.mxu0 0
        %1271 = vmatpush2.bf16.msra.mxu0 0
        %1272 = vmatprep.subr.bf16.mxu0 0
        %1273 = vmatpush2.bf16.msra.mxu0 0
        %1274 = vmatprep.subr.bf16.mxu0 0
        %1275 = vmatpush2.bf16.msra.mxu0 0
        %1276 = vmatprep.subr.bf16.mxu0 0
        %1277 = vmatpush2.bf16.msra.mxu0 0
        %1278 = vmatprep.subr.bf16.mxu0 0
        %1279 = vmatpush2.bf16.msra.mxu0 0
        %1280 = vmatprep.subr.bf16.mxu0 0
        %1281 = vmatpush2.bf16.msra.mxu0 0
        %1282 = vmatprep.subr.bf16.mxu0 0
        %1283 = vmatpush2.bf16.msra.mxu0 0
        %1284 = vmatprep.subr.bf16.mxu0 0
        %1285 = vmatpush2.bf16.msra.mxu0 0
        %1286 = vmatprep.mubr.bf16.mxu0 0
        %1287 = vmatmul.mubr.bf16.gmra.mxu0 %v1212
        %v1288 = vpop.f32.mrf.mxu0
        %v1289 = vadd.f32 0.0, %v1288
        %v1290 = vpop.f32.mrf.mxu0
        %v1291 = vpop.f32.mrf.mxu0
        %v1292 = vpop.f32.mrf.mxu0
        %1293 = vdwg.mxu0
        %1294 = vmatprep.subr.bf16.mxu0 0
        %1295 = vmatpush1.bf16.msra.mxu0 0
        %1296 = vmatprep.subr.bf16.mxu0 0
        %1297 = vmatpush1.bf16.msra.mxu0 0
        %1298 = vmatprep.subr.bf16.mxu0 0
        %1299 = vmatpush1.bf16.msra.mxu0 0
        %1300 = vmatprep.subr.bf16.mxu0 0
        %1301 = vmatpush1.bf16.msra.mxu0 0
        %1302 = vmatprep.subr.bf16.mxu0 0
        %1303 = vmatpush1.bf16.msra.mxu0 0
        %1304 = vmatprep.subr.bf16.mxu0 0
        %1305 = vmatpush1.bf16.msra.mxu0 0
        %1306 = vmatprep.subr.bf16.mxu0 0
        %1307 = vmatpush1.bf16.msra.mxu0 %v828
        %1308 = vmatprep.subr.bf16.mxu0 0
        %1309 = vmatpush1.bf16.msra.mxu0 %v827
        %1310 = vmatprep.subr.bf16.mxu0 0
        %1311 = vmatpush2.bf16.msra.mxu0 0
        %1312 = vmatprep.subr.bf16.mxu0 0
        %1313 = vmatpush2.bf16.msra.mxu0 0
        %1314 = vmatprep.subr.bf16.mxu0 0
        %1315 = vmatpush2.bf16.msra.mxu0 0
        %1316 = vmatprep.subr.bf16.mxu0 0
        %1317 = vmatpush2.bf16.msra.mxu0 0
        %1318 = vmatprep.subr.bf16.mxu0 0
        %1319 = vmatpush2.bf16.msra.mxu0 0
        %1320 = vmatprep.subr.bf16.mxu0 0
        %1321 = vmatpush2.bf16.msra.mxu0 0
        %1322 = vmatprep.subr.bf16.mxu0 0
        %1323 = vmatpush2.bf16.msra.mxu0 0
        %1324 = vmatprep.subr.bf16.mxu0 0
        %1325 = vmatpush2.bf16.msra.mxu0 0
        %1326 = vmatprep.mubr.bf16.mxu0 0
        %1327 = vmatmul.mubr.bf16.gmra.mxu0 %v1212
        %v1328 = vpop.f32.mrf.mxu0
        %v1329 = vadd.f32 %v817, %v1328
        %v1330 = vpop.f32.mrf.mxu0
        %v1331 = vpop.f32.mrf.mxu0
        %v1332 = vpop.f32.mrf.mxu0
        %1333 = vdwg.mxu0
        %v1335 = vrot.slane %v1249, 2
        %v1337 = vadd.f32 %v560, %v1335
        %v1338 = vxor.u32 %v1337, 2147483648
        %v1339 = vmul.f32 %v1338, 1.442695
        %v1340 = vpow.pop %v1339
        %v1341 = vadd.f32 %v1340, 1.0
        %v1342 = vrcp.pop %v1341
        %v1343 = vmul.f32 1.0, %v1342
        %v1345 = vrot.slane %v1289, 2
        %v1347 = vadd.f32 %v623, %v1345
        %v1348 = vxor.u32 %v1347, 2147483648
        %v1349 = vmul.f32 %v1348, 1.442695
        %v1350 = vpow.pop %v1349
        %v1351 = vadd.f32 %v1350, 1.0
        %v1352 = vrcp.pop %v1351
        %v1353 = vmul.f32 1.0, %v1352
        %v1355 = vrot.slane %v1329, 2
        %v1357 = vmul.f32 %v1343, %v1355
        %v1358 = vadd.f32 %v686, %v1357
        %v1359 = vtanh.pop %v1358
        %v1360 = vsub.f32 1.0, %v1353
        %v1361 = vmul.f32 %v1360, %v1359
        %v1363 = vrot.slane %v1207, 6
        %v1365 = vmul.f32 %v1353, %v1363
        %v1366 = vadd.f32 %v1361, %v1365
        %vm1367 = vcmask 261126
        %1368 = vst.msk [vmem:[#allocation2 - $0x6] sm:$0xc0] %vm1367, %v1366
        %p1369 = scmp.eq.s32.totalorder %s28, 1
        // Predicated region
        $region81: #{gru_model_forward.1} parent=75 // pred_check
          %p1370 = pneg %p1369
        $region82: #{gru_model_forward.1} parent=75 // pred_check_branch
          %1372 = sbr.rel (%p1370) target = $region84
        $region83: #{gru_model_forward.1} parent=75 // pred_region
          %1373 = vst.msk [vmem:[#allocation3 - $0x6] sm:$0xc0] %vm1367, %v1366
        $region84: #{gru_model_forward.1} parent=75 // pred_fallthru
          _
        %vm1374 = vcmask 1041408
        %v1375 = vsel %vm1374, %v891, %v1048
        %vm1376 = vcmask 1043456
        %v1377 = vsel %vm1376, %v1375, %v1207
        %vm1378 = vcmask 1045504
        %v1379 = vsel %vm1378, %v1377, %v1366
        %v1380 = vpack.c.bf16 %v1379, %v1379
        %v1381 = vld [vmem:[%s12] sm:$0xf]
        %v1382 = vld [vmem:[%s12 + $0x4] sm:$0xf]
        %v1383 = vld [vmem:[%s12 + $0x8] sm:$0xf]
        %v1384 = vld [vmem:[%s12 + $0xc] sm:$0xf]
        %v1385 = vld [vmem:[%s13] sm:$0x1]
        %v1387 = vlaneseq
        %v1388 = vshrl.u32 %v1387, 7
        %v1389 = vsub.s32 0, %v1388
        %v1390 = vrot.slane %v1385, %v1389
        %v1396 = vunpack.c.l.b16 %v1381
        %v1397 = vunpack.c.l.b16 %v1382
        %v1398 = vunpack.c.l.b16 %v1383
        %v1399 = vunpack.c.l.b16 %v1384
        %v1400 = vpack.c.b16 %v1397, %v1396
        %v1401 = vpack.c.b16 %v1399, %v1398
        %v1405 = vsel %vm521, %v1380, 0
        %1407 = vmatprep.subr.bf16.mxu0 0
        %1408 = vmatpush1.bf16.msra.mxu0 0
        %1409 = vmatprep.subr.bf16.mxu0 0
        %1410 = vmatpush1.bf16.msra.mxu0 0
        %1411 = vmatprep.subr.bf16.mxu0 0
        %1412 = vmatpush1.bf16.msra.mxu0 0
        %1413 = vmatprep.subr.bf16.mxu0 0
        %1414 = vmatpush1.bf16.msra.mxu0 0
        %1415 = vmatprep.subr.bf16.mxu0 0
        %1416 = vmatpush1.bf16.msra.mxu0 0
        %1417 = vmatprep.subr.bf16.mxu0 0
        %1418 = vmatpush1.bf16.msra.mxu0 0
        %1419 = vmatprep.subr.bf16.mxu0 0
        %1420 = vmatpush1.bf16.msra.mxu0 %v1401
        %1421 = vmatprep.subr.bf16.mxu0 0
        %1422 = vmatpush1.bf16.msra.mxu0 %v1400
        %1423 = vmatprep.subr.bf16.mxu0 0
        %1424 = vmatpush2.bf16.msra.mxu0 0
        %1425 = vmatprep.subr.bf16.mxu0 0
        %1426 = vmatpush2.bf16.msra.mxu0 0
        %1427 = vmatprep.subr.bf16.mxu0 0
        %1428 = vmatpush2.bf16.msra.mxu0 0
        %1429 = vmatprep.subr.bf16.mxu0 0
        %1430 = vmatpush2.bf16.msra.mxu0 0
        %1431 = vmatprep.subr.bf16.mxu0 0
        %1432 = vmatpush2.bf16.msra.mxu0 0
        %1433 = vmatprep.subr.bf16.mxu0 0
        %1434 = vmatpush2.bf16.msra.mxu0 0
        %1435 = vmatprep.subr.bf16.mxu0 0
        %1436 = vmatpush2.bf16.msra.mxu0 0
        %1437 = vmatprep.subr.bf16.mxu0 0
        %1438 = vmatpush2.bf16.msra.mxu0 0
        %1439 = vmatprep.mubr.bf16.mxu0 0
        %1440 = vmatmul.mubr.bf16.gmra.mxu0 %v1405
        %v1441 = vpop.f32.mrf.mxu0
        %v1442 = vadd.f32 %v1390, %v1441
        %v1443 = vpop.f32.mrf.mxu0
        %v1444 = vpop.f32.mrf.mxu0
        %v1445 = vpop.f32.mrf.mxu0
        %1446 = vdwg.mxu0
        %1447 = vmax.xlane.f32.xlu0 %v1442
        %v1448 = vpop.xlane.xlu0 %1447
        %v1449 = vsub.f32 %v1442, %v1448
        %v1450 = vmul.f32 %v1449, 1.442695
        %v1451 = vpow.pop %v1450
        %1452 = vadd.xlane.f32.xlu0 %v1451
        %v1453 = vpop.xlane.xlu0 %1452
        %v1454 = vlog2.pop %v1453
        %v1455 = vmul.f32 %v1454, 0.6931472
        %v1456 = vadd.f32 %v1448, %v1455
        %v1457 = vsub.f32 %v1442, %v1456
        %1458 = vst [vmem:[%s488] sm:$0xff] %v1457
        %p1459 = scmp.lt.s32.totalorder %s28, 1
        %s1460 = scalar_select %p1459, %s28, 1
        %s1461 = smul.addr %s1460, 8
        %s1462 = scalar_lea.vmem %s14, %s1461
        // Predicated region
        $region85: #{gru_model_forward.1} parent=75 // pred_check
          %p1463 = pneg %p345
        $region86: #{gru_model_forward.1} parent=75 // pred_check_branch
          %1465 = sbr.rel (%p1463) target = $region88
        $region87: #{gru_model_forward.1} parent=75 // pred_region
          _
        $region88: #{gru_model_forward.1} parent=75 // pred_fallthru
          _
        // Predicated region
        $region89: #{gru_model_forward.1} parent=75 // pred_check
          %p1466 = pneg %p366
        $region90: #{gru_model_forward.1} parent=75 // pred_check_branch
          %1468 = sbr.rel (%p1466) target = $region92
        $region91: #{gru_model_forward.1} parent=75 // pred_region
          %s1470 = ssub.s32 32, 32
          %1471 = vsyncadd [#allocation4], %s1470
          %s1473 = sshll.u32 [#allocation3], 4
          %s1474 = int_to_ptr.vmem [resolvable:$true] %s1473
          %1476 = dma.vmem_to_hbm [thread:$0]  %s1474, 32, %s15, [#allocation4]
        $region92: #{gru_model_forward.1} parent=75 // pred_fallthru
          _
        // Predicated region
        $region93: #{gru_model_forward.1} parent=75 // pred_check
          %p1477 = pneg %p366
        $region94: #{gru_model_forward.1} parent=75 // pred_check_branch
          %1479 = sbr.rel (%p1477) target = $region96
        $region95: #{gru_model_forward.1} parent=75 // pred_region
          %1480 = dma.done [#allocation4], 32
        $region96: #{gru_model_forward.1} parent=75 // pred_fallthru
          _
      $region76: #{gru_model_forward.1} parent=5 // pred_fallthru
        _
      %p1481 = scmp.le.s32.totalorder 2, %s23
      // Predicated region
      $region97: #{gru_model_forward.1} parent=5 // pred_check
        %p1482 = pneg %p1481
      $region98: #{gru_model_forward.1} parent=5 // pred_check_branch
        %1484 = sbr.rel (%p1482) target = $region100
      $region99: #{gru_model_forward.1} parent=5 // pred_region
        %s1485 = ssub.s32 %s23, 2
        // Predicated region
        $region101: #{gru_model_forward.1} parent=99 // pred_check
          %p1486 = pneg %p351
        $region102: #{gru_model_forward.1} parent=99 // pred_check_branch
          %1488 = sbr.rel (%p1486) target = $region104
        $region103: #{gru_model_forward.1} parent=99 // pred_region
          %p1489 = scmp.lt.s32.totalorder %s29, 1
          %s1490 = scalar_select %p1489, %s29, 1
          %s1491 = smul.addr %s1490, 8
          %s1492 = scalar_lea.vmem %s14, %s1491
        $region104: #{gru_model_forward.1} parent=99 // pred_fallthru
          _
      $region100: #{gru_model_forward.1} parent=5 // pred_fallthru
        _
    $region6: #{gru_model_forward.1} parent=1 // loop_footer
      %s27 = sadd.s32 1, %s23
    $region7: #{gru_model_forward.1} parent=1 // loop_footer_branch
      %22 = sbr.rel target = $region3
    $region8: #{gru_model_forward.1} parent=1 // loop_exit
      _
    %1493 = vsyncpa [#allocation4], 1
    %s1494 = scalar_lea.sflag [#allocation4], 1
    %1495 = vsyncpa %s1494, 1

</llo_original>
